<compile_context>
chip_gen: v5e
topology: v5e:2x2
jax: 0.10.0
libtpu: 0.0.40
codegen_flags: <defaults>
</compile_context>

<pallas_src>
import functools

import jax
import jax.numpy as jnp
from jax import lax
from jax.experimental import pallas as pl
from jax.experimental.pallas import tpu as pltpu


def _vq_kernel(n_total, dist_dtype,
               wsq_ref, z_ref, wd_ref, w_ref,
               zq_ref, counts_ref):
    i = pl.program_id(0)
    tm = z_ref.shape[0]
    n_e = w_ref.shape[0]

    # Fold the -2 distance scale into the SMALL (tm, e_dim) operand (VPU work on
    # tm*32 elements, not tm*n_e), and cast to the MXU-native distance dtype.
    z_scaled = (-2.0 * z_ref[...]).astype(dist_dtype)         # (tm, e_dim)

    # (-2 z) . W^T on the MXU, contracting the last dim of BOTH operands
    # (no per-step W^T relayout). wd_ref is a resident, pre-cast codebook copy.
    zw = lax.dot_general(
        z_scaled, wd_ref[...],
        dimension_numbers=(((1,), (1,)), ((), ())),
        preferred_element_type=jnp.float32)                   # (tm, n_e)

    # ||z||^2 dropped: argmin over codes is invariant to a per-row constant.
    # Single add pass (||W||^2 broadcast from (1, n_e)).
    d = wsq_ref[...] + zw                                     # (tm, n_e)

    # argmin over codes (first occurrence of the minimum, like torch.argmin).
    d_min = jnp.min(d, axis=1, keepdims=True)                         # (tm, 1)
    code_iota = lax.broadcasted_iota(jnp.int32, (tm, n_e), 1)         # (tm, n_e)
    idx = jnp.min(jnp.where(d == d_min, code_iota, n_e),
                  axis=1, keepdims=True)                              # (tm, 1)

    # one-hot gather on the MXU; exact in f32 (one-hot is 0/1), so z_q == W[idx].
    onehot = (code_iota == idx).astype(jnp.float32)                   # (tm, n_e)
    z_q = jnp.dot(onehot, w_ref[...], preferred_element_type=jnp.float32)
    # forward value of  z + (z_q - z).detach()  is exactly z_q
    zq_ref[...] = z_q.astype(zq_ref.dtype)

    # per-tile partial code histogram as an MXU matmul: valid(8,tm) x onehot(tm,n_e).
    # This replaces a (tm,n_e) mask-multiply + cross-sublane reduction with MXU work
    # (large slack at K=32). Padded rows (row index >= n_total) are masked out via
    # the cheap (8, tm) 0/1 valid operand; counts <= tm are exact in f32 accumulation.
    row = i * tm + lax.broadcasted_iota(jnp.int32, (8, tm), 1)        # 8 identical rows
    valid = (row < n_total).astype(jnp.float32)                       # (8, tm)
    counts8 = jnp.dot(valid, onehot, preferred_element_type=jnp.float32)  # (8, n_e)
    counts_ref[...] = counts8[0:1][:, None, :]                        # (1, 1, n_e)


def vector_quantizer_forward(z, codebook, *, tm=2048,
                             distance_dtype=jnp.bfloat16):
    """z: (N, e_dim), codebook: (n_e, e_dim) -> (z_q, perplexity).

    tm: row tile (swept parameter; 2048-4096 amortizes per-grid-step overhead).
    distance_dtype: operand dtype for the (-2 z).W^T distance matmul. bf16 (default)
        uses the MXU-native path on v5e/v6e/v7x (near-tie codes may flip; z_q rows
        are still exact codebook entries); jnp.float32 matches the PyTorch forward.
    """
    N, e_dim = z.shape
    n_e, e_dim_w = codebook.shape
    assert e_dim == e_dim_w, "z feature dim must match codebook e_dim"

    # Tile heuristic: big tiles to amortize per-step overhead, but guarantee
    # grid >= 2 whenever N allows so ("parallel",) shards across both v7x TCs.
    half = pl.cdiv(pl.cdiv(N, 2), 8) * 8
    tm_eff = max(8, min(tm, half))
    n_pad = pl.cdiv(N, tm_eff) * tm_eff
    grid = n_pad // tm_eff
    z_p = z if n_pad == N else jnp.pad(z, ((0, n_pad - N), (0, 0)))

    # Hoisted codebook-side work: ||W||^2 and the distance-dtype copy are computed
    # once in the wrapper and passed as resident blocks (no per-step recompute/cast).
    w_f32 = codebook.astype(jnp.float32)
    w_d = codebook.astype(distance_dtype)
    w_sq = jnp.sum(w_f32 * w_f32, axis=1)[None, :]                    # (1, n_e)

    kernel = functools.partial(_vq_kernel, N, distance_dtype)

    bpe_z = jnp.dtype(z.dtype).itemsize
    bpe_d = jnp.dtype(distance_dtype).itemsize
    cost = pl.CostEstimate(
        flops=4 * n_pad * n_e * e_dim + 2 * n_pad * n_e,              # 3 matmuls
        transcendentals=0,
        bytes_accessed=(2 * n_pad * e_dim * bpe_z                     # z in, z_q out
                        + n_e * e_dim * (4 + bpe_d)                   # codebook copies
                        + n_e * 4 + grid * n_e * 4),                  # ||W||^2, counts
    )

    z_q_p, partial_counts = pl.pallas_call(
        kernel,
        out_shape=(
            jax.ShapeDtypeStruct((n_pad, e_dim), z.dtype),
            jax.ShapeDtypeStruct((grid, 1, n_e), jnp.float32),        # per-tile histograms
        ),
        grid_spec=pltpu.PrefetchScalarGridSpec(
            num_scalar_prefetch=0,
            grid=(grid,),
            in_specs=[
                pl.BlockSpec((1, n_e), lambda i: (0, 0)),             # ||W||^2 (resident)
                pl.BlockSpec((tm_eff, e_dim), lambda i: (i, 0)),      # z tile
                pl.BlockSpec((n_e, e_dim), lambda i: (0, 0)),         # codebook, dist dtype
                pl.BlockSpec((n_e, e_dim), lambda i: (0, 0)),         # codebook, f32 (gather)
            ],
            out_specs=[
                pl.BlockSpec((tm_eff, e_dim), lambda i: (i, 0)),      # z_q tile
                pl.BlockSpec((1, 1, n_e), lambda i: (i, 0, 0)),       # per-tile counts
            ],
        ),
        compiler_params=pltpu.CompilerParams(
            dimension_semantics=("parallel",),                        # shards across TCs
            vmem_limit_bytes=48 * 1024 * 1024,                        # big tm on v5e too
        ),
        cost_estimate=cost,
    )(w_sq, z_p, w_d, w_f32)

    z_q = z_q_p if n_pad == N else z_q_p[:N]

    # Tiny finalize in plain JAX (grid x n_e reduction + perplexity).
    e_mean = jnp.sum(partial_counts, axis=(0, 1)) / jnp.float32(N)    # (n_e,)
    perplexity = jnp.exp(-jnp.sum(e_mean * jnp.log(e_mean + 1e-10)))
    return z_q, perplexity


if __name__ == "__main__":
    key = jax.random.PRNGKey(0)
    n_e, e_dim = 256, 32
    B, H, W = 2, 16, 16
    N = B * H * W  # 512 flattened encoder tokens (the 2-D view the forward math uses)

    kz, kw = jax.random.split(key)
    z = jax.random.normal(kz, (N, e_dim), dtype=jnp.float32)
    # deterministic synthetic codebook (stands in for torch.load'ed weights)
    codebook = jax.random.normal(kw, (n_e, e_dim), dtype=jnp.float32)

    # pure-JAX reference of the exact PyTorch forward math
    d = (jnp.sum(z ** 2, axis=1, keepdims=True)
         + jnp.sum(codebook ** 2, axis=1)
         - 2.0 * z @ codebook.T)
    idx_ref = jnp.argmin(d, axis=1)
    zq_ref = codebook[idx_ref]
    onehot_ref = jax.nn.one_hot(idx_ref, n_e, dtype=jnp.float32)
    e_mean_ref = onehot_ref.mean(axis=0)
    perp_ref = jnp.exp(-jnp.sum(e_mean_ref * jnp.log(e_mean_ref + 1e-10)))

    # exact f32 distance path: matches the PyTorch forward
    z_q, perplexity = vector_quantizer_forward(z, codebook,
                                               distance_dtype=jnp.float32)
    jax.block_until_ready((z_q, perplexity))
    assert jnp.allclose(z_q, zq_ref, atol=1e-5), "z_q mismatch"
    assert jnp.allclose(perplexity, perp_ref, atol=1e-4, rtol=1e-4), "perplexity mismatch"

    # default bf16 distance-matmul fast path (all generations): relaxed check, since
    # near-tie codes can legitimately flip under bf16 rounding of z.W^T (z_q rows
    # remain exact codebook entries).
    z_q_bf16, perp_bf16 = vector_quantizer_forward(z, codebook)
    jax.block_until_ready((z_q_bf16, perp_bf16))
    d_chosen = jnp.sum((z - z_q_bf16) ** 2, axis=1)
    assert bool(jnp.all(d_chosen <= d.min(axis=1) + 0.5)), \
        "bf16 code selection too far from optimum"

    print("KERNEL_OK")
</pallas_src>

<mosaic_0001>
module attributes {stable_mosaic.version = 11 : i64} {
  func.func @_vq_kernel(%arg0: i32, %arg1: memref<1x256xf32, #tpu.memory_space<vmem>>, %arg2: memref<256x32xf32, #tpu.memory_space<vmem>>, %arg3: memref<256x32xf32, #tpu.memory_space<vmem>>, %arg4: memref<256x32xf32, #tpu.memory_space<vmem>>, %arg5: memref<256x32xf32, #tpu.memory_space<vmem>>, %arg6: memref<1x1x256xf32, #tpu.memory_space<vmem>>) attributes {dimension_semantics = [#tpu.dimension_semantics<parallel>], iteration_bounds = array<i64: 2>, scalar_prefetch = 0 : i64, scratch_operands = 0 : i64, tpu.core_type = #tpu.core_type<tc>, window_params = [{pipeline_mode = #tpu.pipeline_mode<synchronous>, transform_indices = @transform_0, window_bounds = array<i64: 1, 256>}, {transform_indices = @transform_1, window_bounds = array<i64: 256, 32>}, {pipeline_mode = #tpu.pipeline_mode<synchronous>, transform_indices = @transform_2, window_bounds = array<i64: 256, 32>}, {pipeline_mode = #tpu.pipeline_mode<synchronous>, transform_indices = @transform_3, window_bounds = array<i64: 256, 32>}, {transform_indices = @transform_4, window_bounds = array<i64: 256, 32>}, {transform_indices = @transform_5, window_bounds = array<i64: 1, 1, 256>}]} {
    %c0 = arith.constant 0 : index
    %c0_0 = arith.constant 0 : index
    %0 = vector.load %arg2[%c0, %c0_0] : memref<256x32xf32, #tpu.memory_space<vmem>>, vector<256x32xf32>
    %cst = arith.constant -2.000000e+00 : f32
    %1 = vector.broadcast %cst : f32 to vector<256x32xf32>
    %2 = arith.mulf %1, %0 : vector<256x32xf32>
    %c0_1 = arith.constant 0 : index
    %c0_2 = arith.constant 0 : index
    %3 = vector.load %arg3[%c0_1, %c0_2] : memref<256x32xf32, #tpu.memory_space<vmem>>, vector<256x32xf32>
    %cst_3 = arith.constant dense<0.000000e+00> : vector<256x256xf32>
    %4 = tpu.matmul %2, %3, %cst_3 {dimension_numbers = #tpu.dot_dimension_numbers<[1], [1], [0], [0], [0, 0, 1, 0], [], []>} : vector<256x32xf32>, vector<256x32xf32>, vector<256x256xf32> -> vector<256x256xf32>
    %c0_4 = arith.constant 0 : index
    %c0_5 = arith.constant 0 : index
    %5 = vector.load %arg1[%c0_4, %c0_5] : memref<1x256xf32, #tpu.memory_space<vmem>>, vector<1x256xf32>
    %6 = vector.broadcast %5 : vector<1x256xf32> to vector<256x256xf32>
    %7 = arith.addf %6, %4 : vector<256x256xf32>
    %cst_6 = arith.constant dense<0x7F800000> : vector<256xf32>
    %8 = vector.multi_reduction <minimumf>, %7, %cst_6 [1] : vector<256x256xf32> to vector<256xf32>
    %9 = vector.shape_cast %8 : vector<256xf32> to vector<256x1xf32>
    %10 = tpu.iota {dimensions = array<i32: 1>} : vector<256x256xi32>
    %11 = vector.broadcast %9 : vector<256x1xf32> to vector<256x256xf32>
    %12 = arith.cmpf oeq, %7, %11 : vector<256x256xf32>
    %c256_i32 = arith.constant 256 : i32
    %13 = vector.broadcast %c256_i32 : i32 to vector<256x256xi32>
    %14 = arith.select %12, %10, %13 : vector<256x256xi1>, vector<256x256xi32>
    %cst_7 = arith.constant dense<2147483647> : vector<256xi32>
    %15 = vector.multi_reduction <minsi>, %14, %cst_7 [1] : vector<256x256xi32> to vector<256xi32>
    %16 = vector.shape_cast %15 : vector<256xi32> to vector<256x1xi32>
    %17 = vector.broadcast %16 : vector<256x1xi32> to vector<256x256xi32>
    %18 = arith.cmpi eq, %10, %17 : vector<256x256xi32>
    %19 = arith.extui %18 : vector<256x256xi1> to vector<256x256xi32>
    %20 = arith.sitofp %19 : vector<256x256xi32> to vector<256x256xf32>
    %c0_8 = arith.constant 0 : index
    %c0_9 = arith.constant 0 : index
    %21 = vector.load %arg4[%c0_8, %c0_9] : memref<256x32xf32, #tpu.memory_space<vmem>>, vector<256x32xf32>
    %cst_10 = arith.constant dense<0.000000e+00> : vector<256x32xf32>
    %22 = tpu.matmul %20, %21, %cst_10 {dimension_numbers = #tpu.dot_dimension_numbers<[1], [0], [0], [1], [0, 0, 1, 1], [], []>} : vector<256x256xf32>, vector<256x32xf32>, vector<256x32xf32> -> vector<256x32xf32>
    %c0_11 = arith.constant 0 : index
    %c0_12 = arith.constant 0 : index
    %23 = vector.load %arg5[%c0_11, %c0_12] : memref<256x32xf32, #tpu.memory_space<vmem>>, vector<256x32xf32>
    tpu.vector_store %arg5[%c0_11, %c0_12], %22 {strides = array<i32>} : memref<256x32xf32, #tpu.memory_space<vmem>>, vector<256x32xf32>,
    %c256_i32_13 = arith.constant 256 : i32
    %24 = arith.muli %arg0, %c256_i32_13 : i32
    %25 = tpu.iota {dimensions = array<i32: 1>} : vector<8x256xi32>
    %26 = vector.broadcast %24 : i32 to vector<8x256xi32>
    %27 = arith.addi %26, %25 : vector<8x256xi32>
    %c512_i32 = arith.constant 512 : i32
    %28 = vector.broadcast %c512_i32 : i32 to vector<8x256xi32>
    %29 = arith.cmpi slt, %27, %28 : vector<8x256xi32>
    %30 = arith.extui %29 : vector<8x256xi1> to vector<8x256xi32>
    %31 = arith.sitofp %30 : vector<8x256xi32> to vector<8x256xf32>
    %cst_14 = arith.constant dense<0.000000e+00> : vector<8x256xf32>
    %32 = tpu.matmul %31, %20, %cst_14 {dimension_numbers = #tpu.dot_dimension_numbers<[1], [0], [0], [1], [0, 0, 1, 1], [], []>} : vector<8x256xf32>, vector<256x256xf32>, vector<8x256xf32> -> vector<8x256xf32>
    %33 = vector.extract_strided_slice %32 {offsets = [0, 0], sizes = [1, 256], strides = [1, 1]} : vector<8x256xf32> to vector<1x256xf32>
    %34 = vector.shape_cast %33 : vector<1x256xf32> to vector<1x1x256xf32>
    %c0_15 = arith.constant 0 : index
    %c0_16 = arith.constant 0 : index
    %c0_17 = arith.constant 0 : index
    %35 = vector.load %arg6[%c0_15, %c0_16, %c0_17] : memref<1x1x256xf32, #tpu.memory_space<vmem>>, vector<1x1x256xf32>
    tpu.vector_store %arg6[%c0_15, %c0_16, %c0_17], %34 {strides = array<i32>} : memref<1x1x256xf32, #tpu.memory_space<vmem>>, vector<1x1x256xf32>,
    return
  }
  func.func @transform_0(%arg0: i32) -> (i32, i32) {
    %c0_i32 = arith.constant 0 : i32
    %c0_i32_0 = arith.constant 0 : i32
    %c0_i32_1 = arith.constant 0 : i32
    return %c0_i32, %c0_i32_0 : i32, i32
  }
  func.func @transform_1(%arg0: i32) -> (i32, i32) {
    %c0_i32 = arith.constant 0 : i32
    %c0_i32_0 = arith.constant 0 : i32
    return %arg0, %c0_i32 : i32, i32
  }
  func.func @transform_2(%arg0: i32) -> (i32, i32) {
    %c0_i32 = arith.constant 0 : i32
    %c0_i32_0 = arith.constant 0 : i32
    %c0_i32_1 = arith.constant 0 : i32
    return %c0_i32, %c0_i32_0 : i32, i32
  }
  func.func @transform_3(%arg0: i32) -> (i32, i32) {
    %c0_i32 = arith.constant 0 : i32
    %c0_i32_0 = arith.constant 0 : i32
    %c0_i32_1 = arith.constant 0 : i32
    return %c0_i32, %c0_i32_0 : i32, i32
  }
  func.func @transform_4(%arg0: i32) -> (i32, i32) {
    %c0_i32 = arith.constant 0 : i32
    %c0_i32_0 = arith.constant 0 : i32
    return %arg0, %c0_i32 : i32, i32
  }
  func.func @transform_5(%arg0: i32) -> (i32, i32, i32) {
    %c0_i32 = arith.constant 0 : i32
    %c0_i32_0 = arith.constant 0 : i32
    %c0_i32_1 = arith.constant 0 : i32
    return %arg0, %c0_i32, %c0_i32_0 : i32, i32, i32
  }
}

</mosaic_0001>

<llo_original>
// kernel: tpu_custom_call.1
$region0: #{tpu_custom_call.1}
  #allocation0 [shape = 'u32[]', space=smem, size = 0x4, offset = 0x4, fixed_abs, tag = 'smem constant byte address 0x4 - core index']
  #allocation1 [shape = 'u32[72,128]{1,0:T(1,128)}', space=vmem, size = 0x9000, scoped, tag = 'internal scratch']
  %s0 = inlined_call_operand.vmem [shape: f32[1,256], index: 0, kind: input, shape index: {}]
  %s1 = inlined_call_operand.vmem [shape: f32[512,32], index: 1, kind: input, shape index: {}]
  %s2 = inlined_call_operand.vmem [shape: f32[256,32], index: 2, kind: input, shape index: {}]
  %s3 = inlined_call_operand.vmem [shape: f32[256,32], index: 3, kind: input, shape index: {}]
  %s4 = inlined_call_operand.vmem [shape: f32[512,32], index: 4, kind: output, shape index: {0}]
  %s5 = inlined_call_operand.hbm [shape: f32[2,1,256], index: 5, kind: output, shape index: {1}]
  %6 = xla_tuple %s4, %s5
  %s7 = sld [smem:[#allocation0]]
  $region57: #{tpu_custom_call.1} parent=0
    _
  %s9 = ssub.s32 1, %s7
  %s10 = scalar_select 0, %s9, %s7
  $region1: #{tpu_custom_call.1} parent=0
    #allocation2 [shape = 'u8[2048]{0}', space=vmem, size = 0x800, scoped, tag = 'output window, operand 1']
    #allocation3 [shape = 's32[2]{0}', space=sflag, size = 0x8, scoped, tag = 'scoped memory for tpu_custom_call.1']
    %11 = vsyncpa [#allocation3], 0
    %s12 = scalar_lea.sflag [#allocation3], 1
    %13 = vsyncpa %s12, 0
    loop: start=0, step=1, limit=4
    $region2: #{tpu_custom_call.1} parent=1 // loop_pre_header
      _
    $region3: #{tpu_custom_call.1} parent=1 // loop_header
      %s15 = sphi 0, %s19
      %p16 = scmp.ge.s32.totalorder %s15, 4
      %s23 = sphi 0, %s23
      %s25 = sphi 0, %s23
      %s26 = sphi 0, %s25
      %s40 = sphi 0, %s26
      %s46 = sphi 0, %s48
      %s49 = sphi 0, %s46
      %s50 = sphi 0, %s49
      %s66 = sphi 0, %s50
      %s70 = sphi 0, %s70
      %s72 = sphi 0, %s70
      %s73 = sphi 0, %s72
      %s87 = sphi 0, %s73
      %s91 = sphi 0, %s91
      %s93 = sphi 0, %s91
      %s94 = sphi 0, %s93
      %s108 = sphi 0, %s94
      %s114 = sphi 0, %s116
      %s117 = sphi 0, %s114
      %s118 = sphi 0, %s117
      %s134 = sphi 0, %s118
      %s140 = sphi 0, %s142
      %s143 = sphi 0, %s140
      %s144 = sphi 0, %s143
      %s160 = sphi 0, %s144
    $region4: #{tpu_custom_call.1} parent=1 // loop_header_branch
      %18 = sbr.rel (%p16) target = $region8
    $region5: #{tpu_custom_call.1} parent=1 // loop_body
      %s20 = ssub.s32 %s15, 1
      %s21 = ssub.s32 %s15, 2
      %s22 = sadd.s32 %s15, 1
      %s24 = sadd.s32 %s23, 1
      %p27 = scmp.eq.s32.totalorder %s15, 1
      %p28 = scmp.ne.s32.totalorder %s23, %s25
      %p29 = scmp.eq.s32.totalorder %s15, 0
      %p30 = por %p28, %p29
      %p31 = scmp.ne.s32.totalorder %s23, %s25
      %p32 = scmp.eq.s32.totalorder %s20, 1
      %p33 = por %p31, %p32
      %p34 = scmp.ne.s32.totalorder %s25, %s26
      %p35 = scmp.eq.s32.totalorder %s20, 0
      %p36 = por %p34, %p35
      %p37 = scmp.ne.s32.totalorder %s25, %s26
      %p38 = scmp.eq.s32.totalorder %s21, 1
      %p39 = por %p37, %p38
      %p41 = scmp.ne.s32.totalorder %s26, %s40
      %p42 = scmp.eq.s32.totalorder %s21, 0
      %p43 = por %p41, %p42
      %s44 = ssub.s32 %s15, %s22
      %p45 = scmp.eq.s32.totalorder %s44, 0
      %s47 = sadd.s32 %s46, 1
      %s48 = scalar_select %p45, %s46, %s47
      %p51 = pneg %p45
      %p52 = scmp.eq.s32.totalorder %s15, 1
      %p53 = por %p51, %p52
      %p54 = scmp.ne.s32.totalorder %s46, %s49
      %p55 = scmp.eq.s32.totalorder %s15, 0
      %p56 = por %p54, %p55
      %p57 = scmp.ne.s32.totalorder %s46, %s49
      %p58 = scmp.eq.s32.totalorder %s20, 1
      %p59 = por %p57, %p58
      %p60 = scmp.ne.s32.totalorder %s49, %s50
      %p61 = scmp.eq.s32.totalorder %s20, 0
      %p62 = por %p60, %p61
      %p63 = scmp.ne.s32.totalorder %s49, %s50
      %p64 = scmp.eq.s32.totalorder %s21, 1
      %p65 = por %p63, %p64
      %p67 = scmp.ne.s32.totalorder %s50, %s66
      %p68 = scmp.eq.s32.totalorder %s21, 0
      %p69 = por %p67, %p68
      %s71 = sadd.s32 %s70, 1
      %p74 = scmp.eq.s32.totalorder %s15, 1
      %p75 = scmp.ne.s32.totalorder %s70, %s72
      %p76 = scmp.eq.s32.totalorder %s15, 0
      %p77 = por %p75, %p76
      %p78 = scmp.ne.s32.totalorder %s70, %s72
      %p79 = scmp.eq.s32.totalorder %s20, 1
      %p80 = por %p78, %p79
      %p81 = scmp.ne.s32.totalorder %s72, %s73
      %p82 = scmp.eq.s32.totalorder %s20, 0
      %p83 = por %p81, %p82
      %p84 = scmp.ne.s32.totalorder %s72, %s73
      %p85 = scmp.eq.s32.totalorder %s21, 1
      %p86 = por %p84, %p85
      %p88 = scmp.ne.s32.totalorder %s73, %s87
      %p89 = scmp.eq.s32.totalorder %s21, 0
      %p90 = por %p88, %p89
      %s92 = sadd.s32 %s91, 1
      %p95 = scmp.eq.s32.totalorder %s15, 1
      %p96 = scmp.ne.s32.totalorder %s91, %s93
      %p97 = scmp.eq.s32.totalorder %s15, 0
      %p98 = por %p96, %p97
      %p99 = scmp.ne.s32.totalorder %s91, %s93
      %p100 = scmp.eq.s32.totalorder %s20, 1
      %p101 = por %p99, %p100
      %p102 = scmp.ne.s32.totalorder %s93, %s94
      %p103 = scmp.eq.s32.totalorder %s20, 0
      %p104 = por %p102, %p103
      %p105 = scmp.ne.s32.totalorder %s93, %s94
      %p106 = scmp.eq.s32.totalorder %s21, 1
      %p107 = por %p105, %p106
      %p109 = scmp.ne.s32.totalorder %s94, %s108
      %p110 = scmp.eq.s32.totalorder %s21, 0
      %p111 = por %p109, %p110
      %s112 = ssub.s32 %s15, %s22
      %p113 = scmp.eq.s32.totalorder %s112, 0
      %s115 = sadd.s32 %s114, 1
      %s116 = scalar_select %p113, %s114, %s115
      %p119 = pneg %p113
      %p120 = scmp.eq.s32.totalorder %s15, 1
      %p121 = por %p119, %p120
      %p122 = scmp.ne.s32.totalorder %s114, %s117
      %p123 = scmp.eq.s32.totalorder %s15, 0
      %p124 = por %p122, %p123
      %p125 = scmp.ne.s32.totalorder %s114, %s117
      %p126 = scmp.eq.s32.totalorder %s20, 1
      %p127 = por %p125, %p126
      %p128 = scmp.ne.s32.totalorder %s117, %s118
      %p129 = scmp.eq.s32.totalorder %s20, 0
      %p130 = por %p128, %p129
      %p131 = scmp.ne.s32.totalorder %s117, %s118
      %p132 = scmp.eq.s32.totalorder %s21, 1
      %p133 = por %p131, %p132
      %p135 = scmp.ne.s32.totalorder %s118, %s134
      %p136 = scmp.eq.s32.totalorder %s21, 0
      %p137 = por %p135, %p136
      %s138 = ssub.s32 %s15, %s22
      %p139 = scmp.eq.s32.totalorder %s138, 0
      %s141 = sadd.s32 %s140, 1
      %s142 = scalar_select %p139, %s140, %s141
      %p145 = pneg %p139
      %p146 = scmp.eq.s32.totalorder %s15, 1
      %p147 = por %p145, %p146
      %p148 = scmp.ne.s32.totalorder %s140, %s143
      %p149 = scmp.eq.s32.totalorder %s15, 0
      %p150 = por %p148, %p149
      %p151 = scmp.ne.s32.totalorder %s140, %s143
      %p152 = scmp.eq.s32.totalorder %s20, 1
      %p153 = por %p151, %p152
      %p154 = scmp.ne.s32.totalorder %s143, %s144
      %p155 = scmp.eq.s32.totalorder %s20, 0
      %p156 = por %p154, %p155
      %p157 = scmp.ne.s32.totalorder %s143, %s144
      %p158 = scmp.eq.s32.totalorder %s21, 1
      %p159 = por %p157, %p158
      %p161 = scmp.ne.s32.totalorder %s144, %s160
      %p162 = scmp.eq.s32.totalorder %s21, 0
      %p163 = por %p161, %p162
      %p164 = scmp.le.s32.totalorder 1, %s15
      %p165 = scmp.lt.s32.totalorder %s15, 3
      %p166 = pnand %p164, %p165
      %p167 = pneg %p166
      // Predicated region
      $region9: #{tpu_custom_call.1} parent=5 // pred_check
        _
      $region10: #{tpu_custom_call.1} parent=5 // pred_check_branch
        %169 = sbr.rel (%p166) target = $region12
      $region11: #{tpu_custom_call.1} parent=5 // pred_region
        %s170 = ssub.s32 %s15, 1
        // Predicated region
        $region13: #{tpu_custom_call.1} parent=11 // pred_check
          %p171 = pneg %p36
        $region14: #{tpu_custom_call.1} parent=11 // pred_check_branch
          %173 = sbr.rel (%p171) target = $region16
        $region15: #{tpu_custom_call.1} parent=11 // pred_region
          _
        $region16: #{tpu_custom_call.1} parent=11 // pred_fallthru
          _
        // Predicated region
        $region17: #{tpu_custom_call.1} parent=11 // pred_check
          %p174 = pneg %p83
        $region18: #{tpu_custom_call.1} parent=11 // pred_check_branch
          %176 = sbr.rel (%p174) target = $region20
        $region19: #{tpu_custom_call.1} parent=11 // pred_region
          _
        $region20: #{tpu_custom_call.1} parent=11 // pred_fallthru
          _
        // Predicated region
        $region21: #{tpu_custom_call.1} parent=11 // pred_check
          %p177 = pneg %p104
        $region22: #{tpu_custom_call.1} parent=11 // pred_check_branch
          %179 = sbr.rel (%p177) target = $region24
        $region23: #{tpu_custom_call.1} parent=11 // pred_region
          _
        $region24: #{tpu_custom_call.1} parent=11 // pred_fallthru
          _
      $region12: #{tpu_custom_call.1} parent=5 // pred_fallthru
        _
      %p180 = scmp.lt.s32.totalorder %s15, 2
      // Predicated region
      $region25: #{tpu_custom_call.1} parent=5 // pred_check
        %p181 = pneg %p180
      $region26: #{tpu_custom_call.1} parent=5 // pred_check_branch
        %183 = sbr.rel (%p181) target = $region28
      $region27: #{tpu_custom_call.1} parent=5 // pred_region
        // Predicated region
        $region29: #{tpu_custom_call.1} parent=27 // pred_check
          %p184 = pneg %p56
        $region30: #{tpu_custom_call.1} parent=27 // pred_check_branch
          %186 = sbr.rel (%p184) target = $region32
        $region31: #{tpu_custom_call.1} parent=27 // pred_region
          %s187 = smul.u32 32, %s15
          %p188 = scmp.lt.s32.totalorder %s187, 63
          %s189 = scalar_select %p188, %s187, 63
          %s190 = smul.addr %s189, 8
          %s191 = scalar_lea.vmem %s1, %s190
          %s192 = smul.u32 32, %s15
        $region32: #{tpu_custom_call.1} parent=27 // pred_fallthru
          _
      $region28: #{tpu_custom_call.1} parent=5 // pred_fallthru
        _
      %p193 = scmp.le.s32.totalorder 1, %s15
      %p194 = scmp.lt.s32.totalorder %s15, 3
      %p195 = pnand %p193, %p194
      %p196 = pneg %p195
      // Predicated region
      $region33: #{tpu_custom_call.1} parent=5 // pred_check
        _
      $region34: #{tpu_custom_call.1} parent=5 // pred_check_branch
        %198 = sbr.rel (%p195) target = $region36
      $region35: #{tpu_custom_call.1} parent=5 // pred_region
        %s199 = ssub.s32 %s15, 1
        %p200 = pneg %p36
        %p201 = pneg %p33
        %s202 = smul.u32 32, %s20
        %p203 = scmp.lt.s32.totalorder %s202, 63
        %s204 = scalar_select %p203, %s202, 63
        %s205 = smul.addr %s204, 8
        %s206 = scalar_lea.vmem %s1, %s205
        %p207 = pneg %p62
        %p208 = pneg %p59
        %p209 = pneg %p83
        %p210 = pneg %p80
        %p211 = pneg %p104
        %p212 = pneg %p101
        %p213 = pneg %p130
        %p214 = pneg %p127
        %s215 = smul.u32 32, %s20
        %p216 = scmp.lt.s32.totalorder %s215, 63
        %s217 = scalar_select %p216, %s215, 63
        %s218 = smul.addr %s217, 8
        %s219 = scalar_lea.vmem %s4, %s218
        %p220 = pneg %p156
        %p221 = pneg %p153
        %s222 = sand.u32 %s143, 1
        %s223 = scalar_lea.sflag [#allocation3], %s222
        %s224 = sand.u32 %s143, 1
        %s225 = smul.addr %s224, 2
        %s226 = scalar_lea.vmem [#allocation2], %s225
        %s227 = smul.u32 32, %s20
        %p228 = scmp.lt.s32.totalorder %s227, 63
        %s229 = scalar_select %p228, %s227, 63
        %s230 = smul.addr %s229, 8
        %s231 = scalar_lea.vmem %s1, %s230
        %s232 = smul.u32 32, %s20
        %s233 = smul.u32 32, %s20
        %p234 = scmp.lt.s32.totalorder %s233, 63
        %s235 = scalar_select %p234, %s233, 63
        %s236 = smul.addr %s235, 8
        %s237 = scalar_lea.vmem %s4, %s236
        %s238 = smul.u32 32, %s20
        %v239 = vld [vmem:[%s231] sm:$0xff]
        %v240 = vld [vmem:[%s231 + $0x8] sm:$0xff]
        %v241 = vld [vmem:[%s231 + $0x10] sm:$0xff]
        %v242 = vld [vmem:[%s231 + $0x18] sm:$0xff]
        %v243 = vld [vmem:[%s231 + $0x20] sm:$0xff]
        %v244 = vld [vmem:[%s231 + $0x28] sm:$0xff]
        %v245 = vld [vmem:[%s231 + $0x30] sm:$0xff]
        %v246 = vld [vmem:[%s231 + $0x38] sm:$0xff]
        %v247 = vld [vmem:[%s231 + $0x40] sm:$0xff]
        %v248 = vld [vmem:[%s231 + $0x48] sm:$0xff]
        %v249 = vld [vmem:[%s231 + $0x50] sm:$0xff]
        %v250 = vld [vmem:[%s231 + $0x58] sm:$0xff]
        %v251 = vld [vmem:[%s231 + $0x60] sm:$0xff]
        %v252 = vld [vmem:[%s231 + $0x68] sm:$0xff]
        %v253 = vld [vmem:[%s231 + $0x70] sm:$0xff]
        %v254 = vld [vmem:[%s231 + $0x78] sm:$0xff]
        %v255 = vld [vmem:[%s231 + $0x80] sm:$0xff]
        %v256 = vld [vmem:[%s231 + $0x88] sm:$0xff]
        %v257 = vld [vmem:[%s231 + $0x90] sm:$0xff]
        %v258 = vld [vmem:[%s231 + $0x98] sm:$0xff]
        %v259 = vld [vmem:[%s231 + $0xa0] sm:$0xff]
        %v260 = vld [vmem:[%s231 + $0xa8] sm:$0xff]
        %v261 = vld [vmem:[%s231 + $0xb0] sm:$0xff]
        %v262 = vld [vmem:[%s231 + $0xb8] sm:$0xff]
        %v263 = vld [vmem:[%s231 + $0xc0] sm:$0xff]
        %v264 = vld [vmem:[%s231 + $0xc8] sm:$0xff]
        %v265 = vld [vmem:[%s231 + $0xd0] sm:$0xff]
        %v266 = vld [vmem:[%s231 + $0xd8] sm:$0xff]
        %v267 = vld [vmem:[%s231 + $0xe0] sm:$0xff]
        %v268 = vld [vmem:[%s231 + $0xe8] sm:$0xff]
        %v269 = vld [vmem:[%s231 + $0xf0] sm:$0xff]
        %v270 = vld [vmem:[%s231 + $0xf8] sm:$0xff]
        %v271 = vmul.f32 %v239, -2.0
        %v272 = vmul.f32 %v240, -2.0
        %v273 = vmul.f32 %v241, -2.0
        %v274 = vmul.f32 %v242, -2.0
        %v275 = vmul.f32 %v243, -2.0
        %v276 = vmul.f32 %v244, -2.0
        %v277 = vmul.f32 %v245, -2.0
        %v278 = vmul.f32 %v246, -2.0
        %v279 = vmul.f32 %v247, -2.0
        %v280 = vmul.f32 %v248, -2.0
        %v281 = vmul.f32 %v249, -2.0
        %v282 = vmul.f32 %v250, -2.0
        %v283 = vmul.f32 %v251, -2.0
        %v284 = vmul.f32 %v252, -2.0
        %v285 = vmul.f32 %v253, -2.0
        %v286 = vmul.f32 %v254, -2.0
        %v287 = vmul.f32 %v255, -2.0
        %v288 = vmul.f32 %v256, -2.0
        %v289 = vmul.f32 %v257, -2.0
        %v290 = vmul.f32 %v258, -2.0
        %v291 = vmul.f32 %v259, -2.0
        %v292 = vmul.f32 %v260, -2.0
        %v293 = vmul.f32 %v261, -2.0
        %v294 = vmul.f32 %v262, -2.0
        %v295 = vmul.f32 %v263, -2.0
        %v296 = vmul.f32 %v264, -2.0
        %v297 = vmul.f32 %v265, -2.0
        %v298 = vmul.f32 %v266, -2.0
        %v299 = vmul.f32 %v267, -2.0
        %v300 = vmul.f32 %v268, -2.0
        %v301 = vmul.f32 %v269, -2.0
        %v302 = vmul.f32 %v270, -2.0
        %v303 = vld [vmem:[%s2] sm:$0xff]
        %v304 = vld [vmem:[%s2 + $0x8] sm:$0xff]
        %v305 = vld [vmem:[%s2 + $0x10] sm:$0xff]
        %v306 = vld [vmem:[%s2 + $0x18] sm:$0xff]
        %v307 = vld [vmem:[%s2 + $0x20] sm:$0xff]
        %v308 = vld [vmem:[%s2 + $0x28] sm:$0xff]
        %v309 = vld [vmem:[%s2 + $0x30] sm:$0xff]
        %v310 = vld [vmem:[%s2 + $0x38] sm:$0xff]
        %v311 = vld [vmem:[%s2 + $0x40] sm:$0xff]
        %v312 = vld [vmem:[%s2 + $0x48] sm:$0xff]
        %v313 = vld [vmem:[%s2 + $0x50] sm:$0xff]
        %v314 = vld [vmem:[%s2 + $0x58] sm:$0xff]
        %v315 = vld [vmem:[%s2 + $0x60] sm:$0xff]
        %v316 = vld [vmem:[%s2 + $0x68] sm:$0xff]
        %v317 = vld [vmem:[%s2 + $0x70] sm:$0xff]
        %v318 = vld [vmem:[%s2 + $0x78] sm:$0xff]
        %v319 = vld [vmem:[%s2 + $0x80] sm:$0xff]
        %v320 = vld [vmem:[%s2 + $0x88] sm:$0xff]
        %v321 = vld [vmem:[%s2 + $0x90] sm:$0xff]
        %v322 = vld [vmem:[%s2 + $0x98] sm:$0xff]
        %v323 = vld [vmem:[%s2 + $0xa0] sm:$0xff]
        %v324 = vld [vmem:[%s2 + $0xa8] sm:$0xff]
        %v325 = vld [vmem:[%s2 + $0xb0] sm:$0xff]
        %v326 = vld [vmem:[%s2 + $0xb8] sm:$0xff]
        %v327 = vld [vmem:[%s2 + $0xc0] sm:$0xff]
        %v328 = vld [vmem:[%s2 + $0xc8] sm:$0xff]
        %v329 = vld [vmem:[%s2 + $0xd0] sm:$0xff]
        %v330 = vld [vmem:[%s2 + $0xd8] sm:$0xff]
        %v331 = vld [vmem:[%s2 + $0xe0] sm:$0xff]
        %v332 = vld [vmem:[%s2 + $0xe8] sm:$0xff]
        %v333 = vld [vmem:[%s2 + $0xf0] sm:$0xff]
        %v334 = vld [vmem:[%s2 + $0xf8] sm:$0xff]
        %vm335 = vcmask 261120
        %v337 = vsel %vm335, %v271, 0
        %v340 = vsel %vm335, %v272, 0
        %v343 = vsel %vm335, %v273, 0
        %v346 = vsel %vm335, %v274, 0
        %v349 = vsel %vm335, %v275, 0
        %v352 = vsel %vm335, %v276, 0
        %v355 = vsel %vm335, %v277, 0
        %v358 = vsel %vm335, %v278, 0
        %v361 = vsel %vm335, %v279, 0
        %v364 = vsel %vm335, %v280, 0
        %v367 = vsel %vm335, %v281, 0
        %v370 = vsel %vm335, %v282, 0
        %v373 = vsel %vm335, %v283, 0
        %v376 = vsel %vm335, %v284, 0
        %v379 = vsel %vm335, %v285, 0
        %v382 = vsel %vm335, %v286, 0
        %v385 = vsel %vm335, %v287, 0
        %v388 = vsel %vm335, %v288, 0
        %v391 = vsel %vm335, %v289, 0
        %v394 = vsel %vm335, %v290, 0
        %v397 = vsel %vm335, %v291, 0
        %v400 = vsel %vm335, %v292, 0
        %v403 = vsel %vm335, %v293, 0
        %v406 = vsel %vm335, %v294, 0
        %v409 = vsel %vm335, %v295, 0
        %v412 = vsel %vm335, %v296, 0
        %v415 = vsel %vm335, %v297, 0
        %v418 = vsel %vm335, %v298, 0
        %v421 = vsel %vm335, %v299, 0
        %v424 = vsel %vm335, %v300, 0
        %v427 = vsel %vm335, %v301, 0
        %v430 = vsel %vm335, %v302, 0
        %v433 = vsel %vm335, %v303, 0
        %v436 = vsel %vm335, %v304, 0
        %v439 = vsel %vm335, %v305, 0
        %v442 = vsel %vm335, %v306, 0
        %v445 = vsel %vm335, %v307, 0
        %v448 = vsel %vm335, %v308, 0
        %v451 = vsel %vm335, %v309, 0
        %v454 = vsel %vm335, %v310, 0
        %v457 = vsel %vm335, %v311, 0
        %v460 = vsel %vm335, %v312, 0
        %v463 = vsel %vm335, %v313, 0
        %v466 = vsel %vm335, %v314, 0
        %v469 = vsel %vm335, %v315, 0
        %v472 = vsel %vm335, %v316, 0
        %v475 = vsel %vm335, %v317, 0
        %v478 = vsel %vm335, %v318, 0
        %v481 = vsel %vm335, %v319, 0
        %v484 = vsel %vm335, %v320, 0
        %v487 = vsel %vm335, %v321, 0
        %v490 = vsel %vm335, %v322, 0
        %v493 = vsel %vm335, %v323, 0
        %v496 = vsel %vm335, %v324, 0
        %v499 = vsel %vm335, %v325, 0
        %v502 = vsel %vm335, %v326, 0
        %v505 = vsel %vm335, %v327, 0
        %v508 = vsel %vm335, %v328, 0
        %v511 = vsel %vm335, %v329, 0
        %v514 = vsel %vm335, %v330, 0
        %v517 = vsel %vm335, %v331, 0
        %v520 = vsel %vm335, %v332, 0
        %v523 = vsel %vm335, %v333, 0
        %v526 = vsel %vm335, %v334, 0
        %528 = vmatpush.xpose.msra.mxu0 %v478
        %529 = vmatpush.xpose.msra.mxu0 %v475
        %530 = vmatpush.xpose.msra.mxu0 %v472
        %531 = vmatpush.xpose.msra.mxu0 %v469
        %532 = vmatpush.xpose.msra.mxu0 %v466
        %533 = vmatpush.xpose.msra.mxu0 %v463
        %534 = vmatpush.xpose.msra.mxu0 %v460
        %535 = vmatpush.xpose.msra.mxu0 %v457
        %536 = vmatpush.xpose.msra.mxu0 %v454
        %537 = vmatpush.xpose.msra.mxu0 %v451
        %538 = vmatpush.xpose.msra.mxu0 %v448
        %539 = vmatpush.xpose.msra.mxu0 %v445
        %540 = vmatpush.xpose.msra.mxu0 %v442
        %541 = vmatpush.xpose.msra.mxu0 %v439
        %542 = vmatpush.xpose.msra.mxu0 %v436
        %543 = vmatpush.xpose.msra.mxu0 %v433
        %544 = vmatmul.f32.gmra.mxu0 %v337
        %v545 = vpop.f32.mrf.mxu0
        %v546 = vadd.f32 0.0, %v545
        %547 = vmatmul.f32.gmra.mxu0 %v340
        %v548 = vpop.f32.mrf.mxu0
        %v549 = vadd.f32 0.0, %v548
        %550 = vmatmul.f32.gmra.mxu0 %v343
        %v551 = vpop.f32.mrf.mxu0
        %v552 = vadd.f32 0.0, %v551
        %553 = vmatmul.f32.gmra.mxu0 %v346
        %v554 = vpop.f32.mrf.mxu0
        %v555 = vadd.f32 0.0, %v554
        %556 = vmatmul.f32.gmra.mxu0 %v349
        %v557 = vpop.f32.mrf.mxu0
        %v558 = vadd.f32 0.0, %v557
        %559 = vmatmul.f32.gmra.mxu0 %v352
        %v560 = vpop.f32.mrf.mxu0
        %v561 = vadd.f32 0.0, %v560
        %562 = vmatmul.f32.gmra.mxu0 %v355
        %v563 = vpop.f32.mrf.mxu0
        %v564 = vadd.f32 0.0, %v563
        %565 = vmatmul.f32.gmra.mxu0 %v358
        %v566 = vpop.f32.mrf.mxu0
        %v567 = vadd.f32 0.0, %v566
        %568 = vmatmul.f32.gmra.mxu0 %v361
        %v569 = vpop.f32.mrf.mxu0
        %v570 = vadd.f32 0.0, %v569
        %571 = vmatmul.f32.gmra.mxu0 %v364
        %v572 = vpop.f32.mrf.mxu0
        %v573 = vadd.f32 0.0, %v572
        %574 = vmatmul.f32.gmra.mxu0 %v367
        %v575 = vpop.f32.mrf.mxu0
        %v576 = vadd.f32 0.0, %v575
        %577 = vmatmul.f32.gmra.mxu0 %v370
        %v578 = vpop.f32.mrf.mxu0
        %v579 = vadd.f32 0.0, %v578
        %580 = vmatmul.f32.gmra.mxu0 %v373
        %v581 = vpop.f32.mrf.mxu0
        %v582 = vadd.f32 0.0, %v581
        %583 = vmatmul.f32.gmra.mxu0 %v376
        %v584 = vpop.f32.mrf.mxu0
        %v585 = vadd.f32 0.0, %v584
        %586 = vmatmul.f32.gmra.mxu0 %v379
        %v587 = vpop.f32.mrf.mxu0
        %v588 = vadd.f32 0.0, %v587
        %589 = vmatmul.f32.gmra.mxu0 %v382
        %v590 = vpop.f32.mrf.mxu0
        %v591 = vadd.f32 0.0, %v590
        %592 = vmatmul.f32.gmra.mxu0 %v385
        %v593 = vpop.f32.mrf.mxu0
        %v594 = vadd.f32 0.0, %v593
        %595 = vmatmul.f32.gmra.mxu0 %v388
        %v596 = vpop.f32.mrf.mxu0
        %v597 = vadd.f32 0.0, %v596
        %598 = vmatmul.f32.gmra.mxu0 %v391
        %v599 = vpop.f32.mrf.mxu0
        %v600 = vadd.f32 0.0, %v599
        %601 = vmatmul.f32.gmra.mxu0 %v394
        %v602 = vpop.f32.mrf.mxu0
        %v603 = vadd.f32 0.0, %v602
        %604 = vmatmul.f32.gmra.mxu0 %v397
        %v605 = vpop.f32.mrf.mxu0
        %v606 = vadd.f32 0.0, %v605
        %607 = vmatmul.f32.gmra.mxu0 %v400
        %v608 = vpop.f32.mrf.mxu0
        %v609 = vadd.f32 0.0, %v608
        %610 = vmatmul.f32.gmra.mxu0 %v403
        %v611 = vpop.f32.mrf.mxu0
        %v612 = vadd.f32 0.0, %v611
        %613 = vmatmul.f32.gmra.mxu0 %v406
        %v614 = vpop.f32.mrf.mxu0
        %v615 = vadd.f32 0.0, %v614
        %616 = vmatmul.f32.gmra.mxu0 %v409
        %v617 = vpop.f32.mrf.mxu0
        %v618 = vadd.f32 0.0, %v617
        %619 = vmatmul.f32.gmra.mxu0 %v412
        %v620 = vpop.f32.mrf.mxu0
        %v621 = vadd.f32 0.0, %v620
        %622 = vmatmul.f32.gmra.mxu0 %v415
        %v623 = vpop.f32.mrf.mxu0
        %v624 = vadd.f32 0.0, %v623
        %625 = vmatmul.f32.gmra.mxu0 %v418
        %v626 = vpop.f32.mrf.mxu0
        %v627 = vadd.f32 0.0, %v626
        %628 = vmatmul.f32.gmra.mxu0 %v421
        %v629 = vpop.f32.mrf.mxu0
        %v630 = vadd.f32 0.0, %v629
        %631 = vmatmul.f32.gmra.mxu0 %v424
        %v632 = vpop.f32.mrf.mxu0
        %v633 = vadd.f32 0.0, %v632
        %634 = vmatmul.f32.gmra.mxu0 %v427
        %v635 = vpop.f32.mrf.mxu0
        %v636 = vadd.f32 0.0, %v635
        %637 = vmatmul.f32.gmra.mxu0 %v430
        %v638 = vpop.f32.mrf.mxu0
        %v639 = vadd.f32 0.0, %v638
        %640 = vdwg.mxu0
        %641 = vmatpush.xpose.msra.mxu0 %v526
        %642 = vmatpush.xpose.msra.mxu0 %v523
        %643 = vmatpush.xpose.msra.mxu0 %v520
        %644 = vmatpush.xpose.msra.mxu0 %v517
        %645 = vmatpush.xpose.msra.mxu0 %v514
        %646 = vmatpush.xpose.msra.mxu0 %v511
        %647 = vmatpush.xpose.msra.mxu0 %v508
        %648 = vmatpush.xpose.msra.mxu0 %v505
        %649 = vmatpush.xpose.msra.mxu0 %v502
        %650 = vmatpush.xpose.msra.mxu0 %v499
        %651 = vmatpush.xpose.msra.mxu0 %v496
        %652 = vmatpush.xpose.msra.mxu0 %v493
        %653 = vmatpush.xpose.msra.mxu0 %v490
        %654 = vmatpush.xpose.msra.mxu0 %v487
        %655 = vmatpush.xpose.msra.mxu0 %v484
        %656 = vmatpush.xpose.msra.mxu0 %v481
        %657 = vmatmul.f32.gmra.mxu0 %v337
        %v658 = vpop.f32.mrf.mxu0
        %v659 = vadd.f32 0.0, %v658
        %660 = vmatmul.f32.gmra.mxu0 %v340
        %v661 = vpop.f32.mrf.mxu0
        %v662 = vadd.f32 0.0, %v661
        %663 = vmatmul.f32.gmra.mxu0 %v343
        %v664 = vpop.f32.mrf.mxu0
        %v665 = vadd.f32 0.0, %v664
        %666 = vmatmul.f32.gmra.mxu0 %v346
        %v667 = vpop.f32.mrf.mxu0
        %v668 = vadd.f32 0.0, %v667
        %669 = vmatmul.f32.gmra.mxu0 %v349
        %v670 = vpop.f32.mrf.mxu0
        %v671 = vadd.f32 0.0, %v670
        %672 = vmatmul.f32.gmra.mxu0 %v352
        %v673 = vpop.f32.mrf.mxu0
        %v674 = vadd.f32 0.0, %v673
        %675 = vmatmul.f32.gmra.mxu0 %v355
        %v676 = vpop.f32.mrf.mxu0
        %v677 = vadd.f32 0.0, %v676
        %678 = vmatmul.f32.gmra.mxu0 %v358
        %v679 = vpop.f32.mrf.mxu0
        %v680 = vadd.f32 0.0, %v679
        %681 = vmatmul.f32.gmra.mxu0 %v361
        %v682 = vpop.f32.mrf.mxu0
        %v683 = vadd.f32 0.0, %v682
        %684 = vmatmul.f32.gmra.mxu0 %v364
        %v685 = vpop.f32.mrf.mxu0
        %v686 = vadd.f32 0.0, %v685
        %687 = vmatmul.f32.gmra.mxu0 %v367
        %v688 = vpop.f32.mrf.mxu0
        %v689 = vadd.f32 0.0, %v688
        %690 = vmatmul.f32.gmra.mxu0 %v370
        %v691 = vpop.f32.mrf.mxu0
        %v692 = vadd.f32 0.0, %v691
        %693 = vmatmul.f32.gmra.mxu0 %v373
        %v694 = vpop.f32.mrf.mxu0
        %v695 = vadd.f32 0.0, %v694
        %696 = vmatmul.f32.gmra.mxu0 %v376
        %v697 = vpop.f32.mrf.mxu0
        %v698 = vadd.f32 0.0, %v697
        %699 = vmatmul.f32.gmra.mxu0 %v379
        %v700 = vpop.f32.mrf.mxu0
        %v701 = vadd.f32 0.0, %v700
        %702 = vmatmul.f32.gmra.mxu0 %v382
        %v703 = vpop.f32.mrf.mxu0
        %v704 = vadd.f32 0.0, %v703
        %705 = vmatmul.f32.gmra.mxu0 %v385
        %v706 = vpop.f32.mrf.mxu0
        %v707 = vadd.f32 0.0, %v706
        %708 = vmatmul.f32.gmra.mxu0 %v388
        %v709 = vpop.f32.mrf.mxu0
        %v710 = vadd.f32 0.0, %v709
        %711 = vmatmul.f32.gmra.mxu0 %v391
        %v712 = vpop.f32.mrf.mxu0
        %v713 = vadd.f32 0.0, %v712
        %714 = vmatmul.f32.gmra.mxu0 %v394
        %v715 = vpop.f32.mrf.mxu0
        %v716 = vadd.f32 0.0, %v715
        %717 = vmatmul.f32.gmra.mxu0 %v397
        %v718 = vpop.f32.mrf.mxu0
        %v719 = vadd.f32 0.0, %v718
        %720 = vmatmul.f32.gmra.mxu0 %v400
        %v721 = vpop.f32.mrf.mxu0
        %v722 = vadd.f32 0.0, %v721
        %723 = vmatmul.f32.gmra.mxu0 %v403
        %v724 = vpop.f32.mrf.mxu0
        %v725 = vadd.f32 0.0, %v724
        %726 = vmatmul.f32.gmra.mxu0 %v406
        %v727 = vpop.f32.mrf.mxu0
        %v728 = vadd.f32 0.0, %v727
        %729 = vmatmul.f32.gmra.mxu0 %v409
        %v730 = vpop.f32.mrf.mxu0
        %v731 = vadd.f32 0.0, %v730
        %732 = vmatmul.f32.gmra.mxu0 %v412
        %v733 = vpop.f32.mrf.mxu0
        %v734 = vadd.f32 0.0, %v733
        %735 = vmatmul.f32.gmra.mxu0 %v415
        %v736 = vpop.f32.mrf.mxu0
        %v737 = vadd.f32 0.0, %v736
        %738 = vmatmul.f32.gmra.mxu0 %v418
        %v739 = vpop.f32.mrf.mxu0
        %v740 = vadd.f32 0.0, %v739
        %741 = vmatmul.f32.gmra.mxu0 %v421
        %v742 = vpop.f32.mrf.mxu0
        %v743 = vadd.f32 0.0, %v742
        %744 = vmatmul.f32.gmra.mxu0 %v424
        %v745 = vpop.f32.mrf.mxu0
        %v746 = vadd.f32 0.0, %v745
        %747 = vmatmul.f32.gmra.mxu0 %v427
        %v748 = vpop.f32.mrf.mxu0
        %v749 = vadd.f32 0.0, %v748
        %750 = vmatmul.f32.gmra.mxu0 %v430
        %v751 = vpop.f32.mrf.mxu0
        %v752 = vadd.f32 0.0, %v751
        %753 = vdwg.mxu0
        %v754 = vld [vmem:[%s0] sm:$0x3]
        %v756 = vperm.slane %v754, 0
        %v757 = vperm.slane %v754, 1
        %v760 = vadd.f32 %v756, %v546
        %v761 = vadd.f32 %v757, %v659
        %v762 = vadd.f32 %v756, %v549
        %v763 = vadd.f32 %v757, %v662
        %v764 = vadd.f32 %v756, %v552
        %v765 = vadd.f32 %v757, %v665
        %v766 = vadd.f32 %v756, %v555
        %v767 = vadd.f32 %v757, %v668
        %v768 = vadd.f32 %v756, %v558
        %v769 = vadd.f32 %v757, %v671
        %v770 = vadd.f32 %v756, %v561
        %v771 = vadd.f32 %v757, %v674
        %v772 = vadd.f32 %v756, %v564
        %v773 = vadd.f32 %v757, %v677
        %v774 = vadd.f32 %v756, %v567
        %v775 = vadd.f32 %v757, %v680
        %v776 = vadd.f32 %v756, %v570
        %v777 = vadd.f32 %v757, %v683
        %v778 = vadd.f32 %v756, %v573
        %v779 = vadd.f32 %v757, %v686
        %v780 = vadd.f32 %v756, %v576
        %v781 = vadd.f32 %v757, %v689
        %v782 = vadd.f32 %v756, %v579
        %v783 = vadd.f32 %v757, %v692
        %v784 = vadd.f32 %v756, %v582
        %v785 = vadd.f32 %v757, %v695
        %v786 = vadd.f32 %v756, %v585
        %v787 = vadd.f32 %v757, %v698
        %v788 = vadd.f32 %v756, %v588
        %v789 = vadd.f32 %v757, %v701
        %v790 = vadd.f32 %v756, %v591
        %v791 = vadd.f32 %v757, %v704
        %v792 = vadd.f32 %v756, %v594
        %v793 = vadd.f32 %v757, %v707
        %v794 = vadd.f32 %v756, %v597
        %v795 = vadd.f32 %v757, %v710
        %v796 = vadd.f32 %v756, %v600
        %v797 = vadd.f32 %v757, %v713
        %v798 = vadd.f32 %v756, %v603
        %v799 = vadd.f32 %v757, %v716
        %v800 = vadd.f32 %v756, %v606
        %v801 = vadd.f32 %v757, %v719
        %v802 = vadd.f32 %v756, %v609
        %v803 = vadd.f32 %v757, %v722
        %v804 = vadd.f32 %v756, %v612
        %v805 = vadd.f32 %v757, %v725
        %v806 = vadd.f32 %v756, %v615
        %v807 = vadd.f32 %v757, %v728
        %v808 = vadd.f32 %v756, %v618
        %v809 = vadd.f32 %v757, %v731
        %v810 = vadd.f32 %v756, %v621
        %v811 = vadd.f32 %v757, %v734
        %v812 = vadd.f32 %v756, %v624
        %v813 = vadd.f32 %v757, %v737
        %v814 = vadd.f32 %v756, %v627
        %v815 = vadd.f32 %v757, %v740
        %v816 = vadd.f32 %v756, %v630
        %v817 = vadd.f32 %v757, %v743
        %v818 = vadd.f32 %v756, %v633
        %v819 = vadd.f32 %v757, %v746
        %v820 = vadd.f32 %v756, %v636
        %v821 = vadd.f32 %v757, %v749
        %v822 = vadd.f32 %v756, %v639
        %v823 = vadd.f32 %v757, %v752
        %v824 = vmin.f32 %v760, %v761
        %825 = vmin.xlane.f32.xlu0 %v824
        %v826 = vpop.xlane.xlu0 %825
        %v827 = vmin.f32 %v762, %v763
        %828 = vmin.xlane.f32.xlu0 %v827
        %v829 = vpop.xlane.xlu0 %828
        %v830 = vmin.f32 %v764, %v765
        %831 = vmin.xlane.f32.xlu0 %v830
        %v832 = vpop.xlane.xlu0 %831
        %v833 = vmin.f32 %v766, %v767
        %834 = vmin.xlane.f32.xlu0 %v833
        %v835 = vpop.xlane.xlu0 %834
        %v836 = vmin.f32 %v768, %v769
        %837 = vmin.xlane.f32.xlu0 %v836
        %v838 = vpop.xlane.xlu0 %837
        %v839 = vmin.f32 %v770, %v771
        %840 = vmin.xlane.f32.xlu0 %v839
        %v841 = vpop.xlane.xlu0 %840
        %v842 = vmin.f32 %v772, %v773
        %843 = vmin.xlane.f32.xlu0 %v842
        %v844 = vpop.xlane.xlu0 %843
        %v845 = vmin.f32 %v774, %v775
        %846 = vmin.xlane.f32.xlu0 %v845
        %v847 = vpop.xlane.xlu0 %846
        %v848 = vmin.f32 %v776, %v777
        %849 = vmin.xlane.f32.xlu0 %v848
        %v850 = vpop.xlane.xlu0 %849
        %v851 = vmin.f32 %v778, %v779
        %852 = vmin.xlane.f32.xlu0 %v851
        %v853 = vpop.xlane.xlu0 %852
        %v854 = vmin.f32 %v780, %v781
        %855 = vmin.xlane.f32.xlu0 %v854
        %v856 = vpop.xlane.xlu0 %855
        %v857 = vmin.f32 %v782, %v783
        %858 = vmin.xlane.f32.xlu0 %v857
        %v859 = vpop.xlane.xlu0 %858
        %v860 = vmin.f32 %v784, %v785
        %861 = vmin.xlane.f32.xlu0 %v860
        %v862 = vpop.xlane.xlu0 %861
        %v863 = vmin.f32 %v786, %v787
        %864 = vmin.xlane.f32.xlu0 %v863
        %v865 = vpop.xlane.xlu0 %864
        %v866 = vmin.f32 %v788, %v789
        %867 = vmin.xlane.f32.xlu0 %v866
        %v868 = vpop.xlane.xlu0 %867
        %v869 = vmin.f32 %v790, %v791
        %870 = vmin.xlane.f32.xlu0 %v869
        %v871 = vpop.xlane.xlu0 %870
        %v872 = vmin.f32 %v792, %v793
        %873 = vmin.xlane.f32.xlu0 %v872
        %v874 = vpop.xlane.xlu0 %873
        %v875 = vmin.f32 %v794, %v795
        %876 = vmin.xlane.f32.xlu0 %v875
        %v877 = vpop.xlane.xlu0 %876
        %v878 = vmin.f32 %v796, %v797
        %879 = vmin.xlane.f32.xlu0 %v878
        %v880 = vpop.xlane.xlu0 %879
        %v881 = vmin.f32 %v798, %v799
        %882 = vmin.xlane.f32.xlu0 %v881
        %v883 = vpop.xlane.xlu0 %882
        %v884 = vmin.f32 %v800, %v801
        %885 = vmin.xlane.f32.xlu0 %v884
        %v886 = vpop.xlane.xlu0 %885
        %v887 = vmin.f32 %v802, %v803
        %888 = vmin.xlane.f32.xlu0 %v887
        %v889 = vpop.xlane.xlu0 %888
        %v890 = vmin.f32 %v804, %v805
        %891 = vmin.xlane.f32.xlu0 %v890
        %v892 = vpop.xlane.xlu0 %891
        %v893 = vmin.f32 %v806, %v807
        %894 = vmin.xlane.f32.xlu0 %v893
        %v895 = vpop.xlane.xlu0 %894
        %v896 = vmin.f32 %v808, %v809
        %897 = vmin.xlane.f32.xlu0 %v896
        %v898 = vpop.xlane.xlu0 %897
        %v899 = vmin.f32 %v810, %v811
        %900 = vmin.xlane.f32.xlu0 %v899
        %v901 = vpop.xlane.xlu0 %900
        %v902 = vmin.f32 %v812, %v813
        %903 = vmin.xlane.f32.xlu0 %v902
        %v904 = vpop.xlane.xlu0 %903
        %v905 = vmin.f32 %v814, %v815
        %906 = vmin.xlane.f32.xlu0 %v905
        %v907 = vpop.xlane.xlu0 %906
        %v908 = vmin.f32 %v816, %v817
        %909 = vmin.xlane.f32.xlu0 %v908
        %v910 = vpop.xlane.xlu0 %909
        %v911 = vmin.f32 %v818, %v819
        %912 = vmin.xlane.f32.xlu0 %v911
        %v913 = vpop.xlane.xlu0 %912
        %v914 = vmin.f32 %v820, %v821
        %915 = vmin.xlane.f32.xlu0 %v914
        %v916 = vpop.xlane.xlu0 %915
        %v917 = vmin.f32 %v822, %v823
        %918 = vmin.xlane.f32.xlu0 %v917
        %v919 = vpop.xlane.xlu0 %918
        %v920 = vlaneseq
        %v921 = vand.u32 %v920, 127
        %v922 = vadd.s32 %v921, 128
        %vm923 = vcmp.eq.f32.partialorder %v760, %v826
        %vm924 = vcmp.eq.f32.partialorder %v761, %v826
        %vm925 = vcmp.eq.f32.partialorder %v762, %v829
        %vm926 = vcmp.eq.f32.partialorder %v763, %v829
        %vm927 = vcmp.eq.f32.partialorder %v764, %v832
        %vm928 = vcmp.eq.f32.partialorder %v765, %v832
        %vm929 = vcmp.eq.f32.partialorder %v766, %v835
        %vm930 = vcmp.eq.f32.partialorder %v767, %v835
        %vm931 = vcmp.eq.f32.partialorder %v768, %v838
        %vm932 = vcmp.eq.f32.partialorder %v769, %v838
        %vm933 = vcmp.eq.f32.partialorder %v770, %v841
        %vm934 = vcmp.eq.f32.partialorder %v771, %v841
        %vm935 = vcmp.eq.f32.partialorder %v772, %v844
        %vm936 = vcmp.eq.f32.partialorder %v773, %v844
        %vm937 = vcmp.eq.f32.partialorder %v774, %v847
        %vm938 = vcmp.eq.f32.partialorder %v775, %v847
        %vm939 = vcmp.eq.f32.partialorder %v776, %v850
        %vm940 = vcmp.eq.f32.partialorder %v777, %v850
        %vm941 = vcmp.eq.f32.partialorder %v778, %v853
        %vm942 = vcmp.eq.f32.partialorder %v779, %v853
        %vm943 = vcmp.eq.f32.partialorder %v780, %v856
        %vm944 = vcmp.eq.f32.partialorder %v781, %v856
        %vm945 = vcmp.eq.f32.partialorder %v782, %v859
        %vm946 = vcmp.eq.f32.partialorder %v783, %v859
        %vm947 = vcmp.eq.f32.partialorder %v784, %v862
        %vm948 = vcmp.eq.f32.partialorder %v785, %v862
        %vm949 = vcmp.eq.f32.partialorder %v786, %v865
        %vm950 = vcmp.eq.f32.partialorder %v787, %v865
        %vm951 = vcmp.eq.f32.partialorder %v788, %v868
        %vm952 = vcmp.eq.f32.partialorder %v789, %v868
        %vm953 = vcmp.eq.f32.partialorder %v790, %v871
        %vm954 = vcmp.eq.f32.partialorder %v791, %v871
        %vm955 = vcmp.eq.f32.partialorder %v792, %v874
        %vm956 = vcmp.eq.f32.partialorder %v793, %v874
        %vm957 = vcmp.eq.f32.partialorder %v794, %v877
        %vm958 = vcmp.eq.f32.partialorder %v795, %v877
        %vm959 = vcmp.eq.f32.partialorder %v796, %v880
        %vm960 = vcmp.eq.f32.partialorder %v797, %v880
        %vm961 = vcmp.eq.f32.partialorder %v798, %v883
        %vm962 = vcmp.eq.f32.partialorder %v799, %v883
        %vm963 = vcmp.eq.f32.partialorder %v800, %v886
        %vm964 = vcmp.eq.f32.partialorder %v801, %v886
        %vm965 = vcmp.eq.f32.partialorder %v802, %v889
        %vm966 = vcmp.eq.f32.partialorder %v803, %v889
        %vm967 = vcmp.eq.f32.partialorder %v804, %v892
        %vm968 = vcmp.eq.f32.partialorder %v805, %v892
        %vm969 = vcmp.eq.f32.partialorder %v806, %v895
        %vm970 = vcmp.eq.f32.partialorder %v807, %v895
        %vm971 = vcmp.eq.f32.partialorder %v808, %v898
        %vm972 = vcmp.eq.f32.partialorder %v809, %v898
        %vm973 = vcmp.eq.f32.partialorder %v810, %v901
        %vm974 = vcmp.eq.f32.partialorder %v811, %v901
        %vm975 = vcmp.eq.f32.partialorder %v812, %v904
        %vm976 = vcmp.eq.f32.partialorder %v813, %v904
        %vm977 = vcmp.eq.f32.partialorder %v814, %v907
        %vm978 = vcmp.eq.f32.partialorder %v815, %v907
        %vm979 = vcmp.eq.f32.partialorder %v816, %v910
        %vm980 = vcmp.eq.f32.partialorder %v817, %v910
        %vm981 = vcmp.eq.f32.partialorder %v818, %v913
        %vm982 = vcmp.eq.f32.partialorder %v819, %v913
        %vm983 = vcmp.eq.f32.partialorder %v820, %v916
        %vm984 = vcmp.eq.f32.partialorder %v821, %v916
        %vm985 = vcmp.eq.f32.partialorder %v822, %v919
        %vm986 = vcmp.eq.f32.partialorder %v823, %v919
        %v987 = vsel %vm923, %v921, 256
        %v988 = vsel %vm924, %v922, 256
        %v989 = vsel %vm925, %v921, 256
        %v990 = vsel %vm926, %v922, 256
        %v991 = vsel %vm927, %v921, 256
        %v992 = vsel %vm928, %v922, 256
        %v993 = vsel %vm929, %v921, 256
        %v994 = vsel %vm930, %v922, 256
        %v995 = vsel %vm931, %v921, 256
        %v996 = vsel %vm932, %v922, 256
        %v997 = vsel %vm933, %v921, 256
        %v998 = vsel %vm934, %v922, 256
        %v999 = vsel %vm935, %v921, 256
        %v1000 = vsel %vm936, %v922, 256
        %v1001 = vsel %vm937, %v921, 256
        %v1002 = vsel %vm938, %v922, 256
        %v1003 = vsel %vm939, %v921, 256
        %v1004 = vsel %vm940, %v922, 256
        %v1005 = vsel %vm941, %v921, 256
        %v1006 = vsel %vm942, %v922, 256
        %v1007 = vsel %vm943, %v921, 256
        %v1008 = vsel %vm944, %v922, 256
        %v1009 = vsel %vm945, %v921, 256
        %v1010 = vsel %vm946, %v922, 256
        %v1011 = vsel %vm947, %v921, 256
        %v1012 = vsel %vm948, %v922, 256
        %v1013 = vsel %vm949, %v921, 256
        %v1014 = vsel %vm950, %v922, 256
        %v1015 = vsel %vm951, %v921, 256
        %v1016 = vsel %vm952, %v922, 256
        %v1017 = vsel %vm953, %v921, 256
        %v1018 = vsel %vm954, %v922, 256
        %v1019 = vsel %vm955, %v921, 256
        %v1020 = vsel %vm956, %v922, 256
        %v1021 = vsel %vm957, %v921, 256
        %v1022 = vsel %vm958, %v922, 256
        %v1023 = vsel %vm959, %v921, 256
        %v1024 = vsel %vm960, %v922, 256
        %v1025 = vsel %vm961, %v921, 256
        %v1026 = vsel %vm962, %v922, 256
        %v1027 = vsel %vm963, %v921, 256
        %v1028 = vsel %vm964, %v922, 256
        %v1029 = vsel %vm965, %v921, 256
        %v1030 = vsel %vm966, %v922, 256
        %v1031 = vsel %vm967, %v921, 256
        %v1032 = vsel %vm968, %v922, 256
        %v1033 = vsel %vm969, %v921, 256
        %v1034 = vsel %vm970, %v922, 256
        %v1035 = vsel %vm971, %v921, 256
        %v1036 = vsel %vm972, %v922, 256
        %v1037 = vsel %vm973, %v921, 256
        %v1038 = vsel %vm974, %v922, 256
        %v1039 = vsel %vm975, %v921, 256
        %v1040 = vsel %vm976, %v922, 256
        %v1041 = vsel %vm977, %v921, 256
        %v1042 = vsel %vm978, %v922, 256
        %v1043 = vsel %vm979, %v921, 256
        %v1044 = vsel %vm980, %v922, 256
        %v1045 = vsel %vm981, %v921, 256
        %v1046 = vsel %vm982, %v922, 256
        %v1047 = vsel %vm983, %v921, 256
        %v1048 = vsel %vm984, %v922, 256
        %v1049 = vsel %vm985, %v921, 256
        %v1050 = vsel %vm986, %v922, 256
        %vm1051 = vcmp.lt.s32.totalorder %v987, %v988
        %v1052 = vsel %vm1051, %v987, %v988
        %v1053 = vand.u32 %v1052, 65535
        %v1054 = vshra.s32 %v1052, 16
        %v1055 = vcvt.s32.f32 %v1053
        %v1056 = vcvt.s32.f32 %v1054
        %1057 = vmin.xlane.f32.xlu0 %v1056
        %v1058 = vpop.xlane.xlu0 %1057
        %vm1059 = vcmp.eq.f32.partialorder %v1056, %v1058
        %v1060 = vsel %vm1059, %v1055, inf
        %1061 = vmin.xlane.f32.xlu0 %v1060
        %v1062 = vpop.xlane.xlu0 %1061
        %v1063 = vcvt.f32.s32 %v1062
        %v1064 = vcvt.f32.s32 %v1058
        %v1065 = vshll.u32 %v1064, 16
        %v1066 = vadd.s32 %v1065, %v1063
        %vm1067 = vcmp.lt.s32.totalorder %v989, %v990
        %v1068 = vsel %vm1067, %v989, %v990
        %v1069 = vand.u32 %v1068, 65535
        %v1070 = vshra.s32 %v1068, 16
        %v1071 = vcvt.s32.f32 %v1069
        %v1072 = vcvt.s32.f32 %v1070
        %1073 = vmin.xlane.f32.xlu0 %v1072
        %v1074 = vpop.xlane.xlu0 %1073
        %vm1075 = vcmp.eq.f32.partialorder %v1072, %v1074
        %v1076 = vsel %vm1075, %v1071, inf
        %1077 = vmin.xlane.f32.xlu0 %v1076
        %v1078 = vpop.xlane.xlu0 %1077
        %v1079 = vcvt.f32.s32 %v1078
        %v1080 = vcvt.f32.s32 %v1074
        %v1081 = vshll.u32 %v1080, 16
        %v1082 = vadd.s32 %v1081, %v1079
        %vm1083 = vcmp.lt.s32.totalorder %v991, %v992
        %v1084 = vsel %vm1083, %v991, %v992
        %v1085 = vand.u32 %v1084, 65535
        %v1086 = vshra.s32 %v1084, 16
        %v1087 = vcvt.s32.f32 %v1085
        %v1088 = vcvt.s32.f32 %v1086
        %1089 = vmin.xlane.f32.xlu0 %v1088
        %v1090 = vpop.xlane.xlu0 %1089
        %vm1091 = vcmp.eq.f32.partialorder %v1088, %v1090
        %v1092 = vsel %vm1091, %v1087, inf
        %1093 = vmin.xlane.f32.xlu0 %v1092
        %v1094 = vpop.xlane.xlu0 %1093
        %v1095 = vcvt.f32.s32 %v1094
        %v1096 = vcvt.f32.s32 %v1090
        %v1097 = vshll.u32 %v1096, 16
        %v1098 = vadd.s32 %v1097, %v1095
        %vm1099 = vcmp.lt.s32.totalorder %v993, %v994
        %v1100 = vsel %vm1099, %v993, %v994
        %v1101 = vand.u32 %v1100, 65535
        %v1102 = vshra.s32 %v1100, 16
        %v1103 = vcvt.s32.f32 %v1101
        %v1104 = vcvt.s32.f32 %v1102
        %1105 = vmin.xlane.f32.xlu0 %v1104
        %v1106 = vpop.xlane.xlu0 %1105
        %vm1107 = vcmp.eq.f32.partialorder %v1104, %v1106
        %v1108 = vsel %vm1107, %v1103, inf
        %1109 = vmin.xlane.f32.xlu0 %v1108
        %v1110 = vpop.xlane.xlu0 %1109
        %v1111 = vcvt.f32.s32 %v1110
        %v1112 = vcvt.f32.s32 %v1106
        %v1113 = vshll.u32 %v1112, 16
        %v1114 = vadd.s32 %v1113, %v1111
        %vm1115 = vcmp.lt.s32.totalorder %v995, %v996
        %v1116 = vsel %vm1115, %v995, %v996
        %v1117 = vand.u32 %v1116, 65535
        %v1118 = vshra.s32 %v1116, 16
        %v1119 = vcvt.s32.f32 %v1117
        %v1120 = vcvt.s32.f32 %v1118
        %1121 = vmin.xlane.f32.xlu0 %v1120
        %v1122 = vpop.xlane.xlu0 %1121
        %vm1123 = vcmp.eq.f32.partialorder %v1120, %v1122
        %v1124 = vsel %vm1123, %v1119, inf
        %1125 = vmin.xlane.f32.xlu0 %v1124
        %v1126 = vpop.xlane.xlu0 %1125
        %v1127 = vcvt.f32.s32 %v1126
        %v1128 = vcvt.f32.s32 %v1122
        %v1129 = vshll.u32 %v1128, 16
        %v1130 = vadd.s32 %v1129, %v1127
        %vm1131 = vcmp.lt.s32.totalorder %v997, %v998
        %v1132 = vsel %vm1131, %v997, %v998
        %v1133 = vand.u32 %v1132, 65535
        %v1134 = vshra.s32 %v1132, 16
        %v1135 = vcvt.s32.f32 %v1133
        %v1136 = vcvt.s32.f32 %v1134
        %1137 = vmin.xlane.f32.xlu0 %v1136
        %v1138 = vpop.xlane.xlu0 %1137
        %vm1139 = vcmp.eq.f32.partialorder %v1136, %v1138
        %v1140 = vsel %vm1139, %v1135, inf
        %1141 = vmin.xlane.f32.xlu0 %v1140
        %v1142 = vpop.xlane.xlu0 %1141
        %v1143 = vcvt.f32.s32 %v1142
        %v1144 = vcvt.f32.s32 %v1138
        %v1145 = vshll.u32 %v1144, 16
        %v1146 = vadd.s32 %v1145, %v1143
        %vm1147 = vcmp.lt.s32.totalorder %v999, %v1000
        %v1148 = vsel %vm1147, %v999, %v1000
        %v1149 = vand.u32 %v1148, 65535
        %v1150 = vshra.s32 %v1148, 16
        %v1151 = vcvt.s32.f32 %v1149
        %v1152 = vcvt.s32.f32 %v1150
        %1153 = vmin.xlane.f32.xlu0 %v1152
        %v1154 = vpop.xlane.xlu0 %1153
        %vm1155 = vcmp.eq.f32.partialorder %v1152, %v1154
        %v1156 = vsel %vm1155, %v1151, inf
        %1157 = vmin.xlane.f32.xlu0 %v1156
        %v1158 = vpop.xlane.xlu0 %1157
        %v1159 = vcvt.f32.s32 %v1158
        %v1160 = vcvt.f32.s32 %v1154
        %v1161 = vshll.u32 %v1160, 16
        %v1162 = vadd.s32 %v1161, %v1159
        %vm1163 = vcmp.lt.s32.totalorder %v1001, %v1002
        %v1164 = vsel %vm1163, %v1001, %v1002
        %v1165 = vand.u32 %v1164, 65535
        %v1166 = vshra.s32 %v1164, 16
        %v1167 = vcvt.s32.f32 %v1165
        %v1168 = vcvt.s32.f32 %v1166
        %1169 = vmin.xlane.f32.xlu0 %v1168
        %v1170 = vpop.xlane.xlu0 %1169
        %vm1171 = vcmp.eq.f32.partialorder %v1168, %v1170
        %v1172 = vsel %vm1171, %v1167, inf
        %1173 = vmin.xlane.f32.xlu0 %v1172
        %v1174 = vpop.xlane.xlu0 %1173
        %v1175 = vcvt.f32.s32 %v1174
        %v1176 = vcvt.f32.s32 %v1170
        %v1177 = vshll.u32 %v1176, 16
        %v1178 = vadd.s32 %v1177, %v1175
        %vm1179 = vcmp.lt.s32.totalorder %v1003, %v1004
        %v1180 = vsel %vm1179, %v1003, %v1004
        %v1181 = vand.u32 %v1180, 65535
        %v1182 = vshra.s32 %v1180, 16
        %v1183 = vcvt.s32.f32 %v1181
        %v1184 = vcvt.s32.f32 %v1182
        %1185 = vmin.xlane.f32.xlu0 %v1184
        %v1186 = vpop.xlane.xlu0 %1185
        %vm1187 = vcmp.eq.f32.partialorder %v1184, %v1186
        %v1188 = vsel %vm1187, %v1183, inf
        %1189 = vmin.xlane.f32.xlu0 %v1188
        %v1190 = vpop.xlane.xlu0 %1189
        %v1191 = vcvt.f32.s32 %v1190
        %v1192 = vcvt.f32.s32 %v1186
        %v1193 = vshll.u32 %v1192, 16
        %v1194 = vadd.s32 %v1193, %v1191
        %vm1195 = vcmp.lt.s32.totalorder %v1005, %v1006
        %v1196 = vsel %vm1195, %v1005, %v1006
        %v1197 = vand.u32 %v1196, 65535
        %v1198 = vshra.s32 %v1196, 16
        %v1199 = vcvt.s32.f32 %v1197
        %v1200 = vcvt.s32.f32 %v1198
        %1201 = vmin.xlane.f32.xlu0 %v1200
        %v1202 = vpop.xlane.xlu0 %1201
        %vm1203 = vcmp.eq.f32.partialorder %v1200, %v1202
        %v1204 = vsel %vm1203, %v1199, inf
        %1205 = vmin.xlane.f32.xlu0 %v1204
        %v1206 = vpop.xlane.xlu0 %1205
        %v1207 = vcvt.f32.s32 %v1206
        %v1208 = vcvt.f32.s32 %v1202
        %v1209 = vshll.u32 %v1208, 16
        %v1210 = vadd.s32 %v1209, %v1207
        %vm1211 = vcmp.lt.s32.totalorder %v1007, %v1008
        %v1212 = vsel %vm1211, %v1007, %v1008
        %v1213 = vand.u32 %v1212, 65535
        %v1214 = vshra.s32 %v1212, 16
        %v1215 = vcvt.s32.f32 %v1213
        %v1216 = vcvt.s32.f32 %v1214
        %1217 = vmin.xlane.f32.xlu0 %v1216
        %v1218 = vpop.xlane.xlu0 %1217
        %vm1219 = vcmp.eq.f32.partialorder %v1216, %v1218
        %v1220 = vsel %vm1219, %v1215, inf
        %1221 = vmin.xlane.f32.xlu0 %v1220
        %v1222 = vpop.xlane.xlu0 %1221
        %v1223 = vcvt.f32.s32 %v1222
        %v1224 = vcvt.f32.s32 %v1218
        %v1225 = vshll.u32 %v1224, 16
        %v1226 = vadd.s32 %v1225, %v1223
        %vm1227 = vcmp.lt.s32.totalorder %v1009, %v1010
        %v1228 = vsel %vm1227, %v1009, %v1010
        %v1229 = vand.u32 %v1228, 65535
        %v1230 = vshra.s32 %v1228, 16
        %v1231 = vcvt.s32.f32 %v1229
        %v1232 = vcvt.s32.f32 %v1230
        %1233 = vmin.xlane.f32.xlu0 %v1232
        %v1234 = vpop.xlane.xlu0 %1233
        %vm1235 = vcmp.eq.f32.partialorder %v1232, %v1234
        %v1236 = vsel %vm1235, %v1231, inf
        %1237 = vmin.xlane.f32.xlu0 %v1236
        %v1238 = vpop.xlane.xlu0 %1237
        %v1239 = vcvt.f32.s32 %v1238
        %v1240 = vcvt.f32.s32 %v1234
        %v1241 = vshll.u32 %v1240, 16
        %v1242 = vadd.s32 %v1241, %v1239
        %vm1243 = vcmp.lt.s32.totalorder %v1011, %v1012
        %v1244 = vsel %vm1243, %v1011, %v1012
        %v1245 = vand.u32 %v1244, 65535
        %v1246 = vshra.s32 %v1244, 16
        %v1247 = vcvt.s32.f32 %v1245
        %v1248 = vcvt.s32.f32 %v1246
        %1249 = vmin.xlane.f32.xlu0 %v1248
        %v1250 = vpop.xlane.xlu0 %1249
        %vm1251 = vcmp.eq.f32.partialorder %v1248, %v1250
        %v1252 = vsel %vm1251, %v1247, inf
        %1253 = vmin.xlane.f32.xlu0 %v1252
        %v1254 = vpop.xlane.xlu0 %1253
        %v1255 = vcvt.f32.s32 %v1254
        %v1256 = vcvt.f32.s32 %v1250
        %v1257 = vshll.u32 %v1256, 16
        %v1258 = vadd.s32 %v1257, %v1255
        %vm1259 = vcmp.lt.s32.totalorder %v1013, %v1014
        %v1260 = vsel %vm1259, %v1013, %v1014
        %v1261 = vand.u32 %v1260, 65535
        %v1262 = vshra.s32 %v1260, 16
        %v1263 = vcvt.s32.f32 %v1261
        %v1264 = vcvt.s32.f32 %v1262
        %1265 = vmin.xlane.f32.xlu0 %v1264
        %v1266 = vpop.xlane.xlu0 %1265
        %vm1267 = vcmp.eq.f32.partialorder %v1264, %v1266
        %v1268 = vsel %vm1267, %v1263, inf
        %1269 = vmin.xlane.f32.xlu0 %v1268
        %v1270 = vpop.xlane.xlu0 %1269
        %v1271 = vcvt.f32.s32 %v1270
        %v1272 = vcvt.f32.s32 %v1266
        %v1273 = vshll.u32 %v1272, 16
        %v1274 = vadd.s32 %v1273, %v1271
        %vm1275 = vcmp.lt.s32.totalorder %v1015, %v1016
        %v1276 = vsel %vm1275, %v1015, %v1016
        %v1277 = vand.u32 %v1276, 65535
        %v1278 = vshra.s32 %v1276, 16
        %v1279 = vcvt.s32.f32 %v1277
        %v1280 = vcvt.s32.f32 %v1278
        %1281 = vmin.xlane.f32.xlu0 %v1280
        %v1282 = vpop.xlane.xlu0 %1281
        %vm1283 = vcmp.eq.f32.partialorder %v1280, %v1282
        %v1284 = vsel %vm1283, %v1279, inf
        %1285 = vmin.xlane.f32.xlu0 %v1284
        %v1286 = vpop.xlane.xlu0 %1285
        %v1287 = vcvt.f32.s32 %v1286
        %v1288 = vcvt.f32.s32 %v1282
        %v1289 = vshll.u32 %v1288, 16
        %v1290 = vadd.s32 %v1289, %v1287
        %vm1291 = vcmp.lt.s32.totalorder %v1017, %v1018
        %v1292 = vsel %vm1291, %v1017, %v1018
        %v1293 = vand.u32 %v1292, 65535
        %v1294 = vshra.s32 %v1292, 16
        %v1295 = vcvt.s32.f32 %v1293
        %v1296 = vcvt.s32.f32 %v1294
        %1297 = vmin.xlane.f32.xlu0 %v1296
        %v1298 = vpop.xlane.xlu0 %1297
        %vm1299 = vcmp.eq.f32.partialorder %v1296, %v1298
        %v1300 = vsel %vm1299, %v1295, inf
        %1301 = vmin.xlane.f32.xlu0 %v1300
        %v1302 = vpop.xlane.xlu0 %1301
        %v1303 = vcvt.f32.s32 %v1302
        %v1304 = vcvt.f32.s32 %v1298
        %v1305 = vshll.u32 %v1304, 16
        %v1306 = vadd.s32 %v1305, %v1303
        %vm1307 = vcmp.lt.s32.totalorder %v1019, %v1020
        %v1308 = vsel %vm1307, %v1019, %v1020
        %v1309 = vand.u32 %v1308, 65535
        %v1310 = vshra.s32 %v1308, 16
        %v1311 = vcvt.s32.f32 %v1309
        %v1312 = vcvt.s32.f32 %v1310
        %1313 = vmin.xlane.f32.xlu0 %v1312
        %v1314 = vpop.xlane.xlu0 %1313
        %vm1315 = vcmp.eq.f32.partialorder %v1312, %v1314
        %v1316 = vsel %vm1315, %v1311, inf
        %1317 = vmin.xlane.f32.xlu0 %v1316
        %v1318 = vpop.xlane.xlu0 %1317
        %v1319 = vcvt.f32.s32 %v1318
        %v1320 = vcvt.f32.s32 %v1314
        %v1321 = vshll.u32 %v1320, 16
        %v1322 = vadd.s32 %v1321, %v1319
        %vm1323 = vcmp.lt.s32.totalorder %v1021, %v1022
        %v1324 = vsel %vm1323, %v1021, %v1022
        %v1325 = vand.u32 %v1324, 65535
        %v1326 = vshra.s32 %v1324, 16
        %v1327 = vcvt.s32.f32 %v1325
        %v1328 = vcvt.s32.f32 %v1326
        %1329 = vmin.xlane.f32.xlu0 %v1328
        %v1330 = vpop.xlane.xlu0 %1329
        %vm1331 = vcmp.eq.f32.partialorder %v1328, %v1330
        %v1332 = vsel %vm1331, %v1327, inf
        %1333 = vmin.xlane.f32.xlu0 %v1332
        %v1334 = vpop.xlane.xlu0 %1333
        %v1335 = vcvt.f32.s32 %v1334
        %v1336 = vcvt.f32.s32 %v1330
        %v1337 = vshll.u32 %v1336, 16
        %v1338 = vadd.s32 %v1337, %v1335
        %vm1339 = vcmp.lt.s32.totalorder %v1023, %v1024
        %v1340 = vsel %vm1339, %v1023, %v1024
        %v1341 = vand.u32 %v1340, 65535
        %v1342 = vshra.s32 %v1340, 16
        %v1343 = vcvt.s32.f32 %v1341
        %v1344 = vcvt.s32.f32 %v1342
        %1345 = vmin.xlane.f32.xlu0 %v1344
        %v1346 = vpop.xlane.xlu0 %1345
        %vm1347 = vcmp.eq.f32.partialorder %v1344, %v1346
        %v1348 = vsel %vm1347, %v1343, inf
        %1349 = vmin.xlane.f32.xlu0 %v1348
        %v1350 = vpop.xlane.xlu0 %1349
        %v1351 = vcvt.f32.s32 %v1350
        %v1352 = vcvt.f32.s32 %v1346
        %v1353 = vshll.u32 %v1352, 16
        %v1354 = vadd.s32 %v1353, %v1351
        %vm1355 = vcmp.lt.s32.totalorder %v1025, %v1026
        %v1356 = vsel %vm1355, %v1025, %v1026
        %v1357 = vand.u32 %v1356, 65535
        %v1358 = vshra.s32 %v1356, 16
        %v1359 = vcvt.s32.f32 %v1357
        %v1360 = vcvt.s32.f32 %v1358
        %1361 = vmin.xlane.f32.xlu0 %v1360
        %v1362 = vpop.xlane.xlu0 %1361
        %vm1363 = vcmp.eq.f32.partialorder %v1360, %v1362
        %v1364 = vsel %vm1363, %v1359, inf
        %1365 = vmin.xlane.f32.xlu0 %v1364
        %v1366 = vpop.xlane.xlu0 %1365
        %v1367 = vcvt.f32.s32 %v1366
        %v1368 = vcvt.f32.s32 %v1362
        %v1369 = vshll.u32 %v1368, 16
        %v1370 = vadd.s32 %v1369, %v1367
        %vm1371 = vcmp.lt.s32.totalorder %v1027, %v1028
        %v1372 = vsel %vm1371, %v1027, %v1028
        %v1373 = vand.u32 %v1372, 65535
        %v1374 = vshra.s32 %v1372, 16
        %v1375 = vcvt.s32.f32 %v1373
        %v1376 = vcvt.s32.f32 %v1374
        %1377 = vmin.xlane.f32.xlu0 %v1376
        %v1378 = vpop.xlane.xlu0 %1377
        %vm1379 = vcmp.eq.f32.partialorder %v1376, %v1378
        %v1380 = vsel %vm1379, %v1375, inf
        %1381 = vmin.xlane.f32.xlu0 %v1380
        %v1382 = vpop.xlane.xlu0 %1381
        %v1383 = vcvt.f32.s32 %v1382
        %v1384 = vcvt.f32.s32 %v1378
        %v1385 = vshll.u32 %v1384, 16
        %v1386 = vadd.s32 %v1385, %v1383
        %vm1387 = vcmp.lt.s32.totalorder %v1029, %v1030
        %v1388 = vsel %vm1387, %v1029, %v1030
        %v1389 = vand.u32 %v1388, 65535
        %v1390 = vshra.s32 %v1388, 16
        %v1391 = vcvt.s32.f32 %v1389
        %v1392 = vcvt.s32.f32 %v1390
        %1393 = vmin.xlane.f32.xlu0 %v1392
        %v1394 = vpop.xlane.xlu0 %1393
        %vm1395 = vcmp.eq.f32.partialorder %v1392, %v1394
        %v1396 = vsel %vm1395, %v1391, inf
        %1397 = vmin.xlane.f32.xlu0 %v1396
        %v1398 = vpop.xlane.xlu0 %1397
        %v1399 = vcvt.f32.s32 %v1398
        %v1400 = vcvt.f32.s32 %v1394
        %v1401 = vshll.u32 %v1400, 16
        %v1402 = vadd.s32 %v1401, %v1399
        %vm1403 = vcmp.lt.s32.totalorder %v1031, %v1032
        %v1404 = vsel %vm1403, %v1031, %v1032
        %v1405 = vand.u32 %v1404, 65535
        %v1406 = vshra.s32 %v1404, 16
        %v1407 = vcvt.s32.f32 %v1405
        %v1408 = vcvt.s32.f32 %v1406
        %1409 = vmin.xlane.f32.xlu0 %v1408
        %v1410 = vpop.xlane.xlu0 %1409
        %vm1411 = vcmp.eq.f32.partialorder %v1408, %v1410
        %v1412 = vsel %vm1411, %v1407, inf
        %1413 = vmin.xlane.f32.xlu0 %v1412
        %v1414 = vpop.xlane.xlu0 %1413
        %v1415 = vcvt.f32.s32 %v1414
        %v1416 = vcvt.f32.s32 %v1410
        %v1417 = vshll.u32 %v1416, 16
        %v1418 = vadd.s32 %v1417, %v1415
        %vm1419 = vcmp.lt.s32.totalorder %v1033, %v1034
        %v1420 = vsel %vm1419, %v1033, %v1034
        %v1421 = vand.u32 %v1420, 65535
        %v1422 = vshra.s32 %v1420, 16
        %v1423 = vcvt.s32.f32 %v1421
        %v1424 = vcvt.s32.f32 %v1422
        %1425 = vmin.xlane.f32.xlu0 %v1424
        %v1426 = vpop.xlane.xlu0 %1425
        %vm1427 = vcmp.eq.f32.partialorder %v1424, %v1426
        %v1428 = vsel %vm1427, %v1423, inf
        %1429 = vmin.xlane.f32.xlu0 %v1428
        %v1430 = vpop.xlane.xlu0 %1429
        %v1431 = vcvt.f32.s32 %v1430
        %v1432 = vcvt.f32.s32 %v1426
        %v1433 = vshll.u32 %v1432, 16
        %v1434 = vadd.s32 %v1433, %v1431
        %vm1435 = vcmp.lt.s32.totalorder %v1035, %v1036
        %v1436 = vsel %vm1435, %v1035, %v1036
        %v1437 = vand.u32 %v1436, 65535
        %v1438 = vshra.s32 %v1436, 16
        %v1439 = vcvt.s32.f32 %v1437
        %v1440 = vcvt.s32.f32 %v1438
        %1441 = vmin.xlane.f32.xlu0 %v1440
        %v1442 = vpop.xlane.xlu0 %1441
        %vm1443 = vcmp.eq.f32.partialorder %v1440, %v1442
        %v1444 = vsel %vm1443, %v1439, inf
        %1445 = vmin.xlane.f32.xlu0 %v1444
        %v1446 = vpop.xlane.xlu0 %1445
        %v1447 = vcvt.f32.s32 %v1446
        %v1448 = vcvt.f32.s32 %v1442
        %v1449 = vshll.u32 %v1448, 16
        %v1450 = vadd.s32 %v1449, %v1447
        %vm1451 = vcmp.lt.s32.totalorder %v1037, %v1038
        %v1452 = vsel %vm1451, %v1037, %v1038
        %v1453 = vand.u32 %v1452, 65535
        %v1454 = vshra.s32 %v1452, 16
        %v1455 = vcvt.s32.f32 %v1453
        %v1456 = vcvt.s32.f32 %v1454
        %1457 = vmin.xlane.f32.xlu0 %v1456
        %v1458 = vpop.xlane.xlu0 %1457
        %vm1459 = vcmp.eq.f32.partialorder %v1456, %v1458
        %v1460 = vsel %vm1459, %v1455, inf
        %1461 = vmin.xlane.f32.xlu0 %v1460
        %v1462 = vpop.xlane.xlu0 %1461
        %v1463 = vcvt.f32.s32 %v1462
        %v1464 = vcvt.f32.s32 %v1458
        %v1465 = vshll.u32 %v1464, 16
        %v1466 = vadd.s32 %v1465, %v1463
        %vm1467 = vcmp.lt.s32.totalorder %v1039, %v1040
        %v1468 = vsel %vm1467, %v1039, %v1040
        %v1469 = vand.u32 %v1468, 65535
        %v1470 = vshra.s32 %v1468, 16
        %v1471 = vcvt.s32.f32 %v1469
        %v1472 = vcvt.s32.f32 %v1470
        %1473 = vmin.xlane.f32.xlu0 %v1472
        %v1474 = vpop.xlane.xlu0 %1473
        %vm1475 = vcmp.eq.f32.partialorder %v1472, %v1474
        %v1476 = vsel %vm1475, %v1471, inf
        %1477 = vmin.xlane.f32.xlu0 %v1476
        %v1478 = vpop.xlane.xlu0 %1477
        %v1479 = vcvt.f32.s32 %v1478
        %v1480 = vcvt.f32.s32 %v1474
        %v1481 = vshll.u32 %v1480, 16
        %v1482 = vadd.s32 %v1481, %v1479
        %vm1483 = vcmp.lt.s32.totalorder %v1041, %v1042
        %v1484 = vsel %vm1483, %v1041, %v1042
        %v1485 = vand.u32 %v1484, 65535
        %v1486 = vshra.s32 %v1484, 16
        %v1487 = vcvt.s32.f32 %v1485
        %v1488 = vcvt.s32.f32 %v1486
        %1489 = vmin.xlane.f32.xlu0 %v1488
        %v1490 = vpop.xlane.xlu0 %1489
        %vm1491 = vcmp.eq.f32.partialorder %v1488, %v1490
        %v1492 = vsel %vm1491, %v1487, inf
        %1493 = vmin.xlane.f32.xlu0 %v1492
        %v1494 = vpop.xlane.xlu0 %1493
        %v1495 = vcvt.f32.s32 %v1494
        %v1496 = vcvt.f32.s32 %v1490
        %v1497 = vshll.u32 %v1496, 16
        %v1498 = vadd.s32 %v1497, %v1495
        %vm1499 = vcmp.lt.s32.totalorder %v1043, %v1044
        %v1500 = vsel %vm1499, %v1043, %v1044
        %v1501 = vand.u32 %v1500, 65535
        %v1502 = vshra.s32 %v1500, 16
        %v1503 = vcvt.s32.f32 %v1501
        %v1504 = vcvt.s32.f32 %v1502
        %1505 = vmin.xlane.f32.xlu0 %v1504
        %v1506 = vpop.xlane.xlu0 %1505
        %vm1507 = vcmp.eq.f32.partialorder %v1504, %v1506
        %v1508 = vsel %vm1507, %v1503, inf
        %1509 = vmin.xlane.f32.xlu0 %v1508
        %v1510 = vpop.xlane.xlu0 %1509
        %v1511 = vcvt.f32.s32 %v1510
        %v1512 = vcvt.f32.s32 %v1506
        %v1513 = vshll.u32 %v1512, 16
        %v1514 = vadd.s32 %v1513, %v1511
        %vm1515 = vcmp.lt.s32.totalorder %v1045, %v1046
        %v1516 = vsel %vm1515, %v1045, %v1046
        %v1517 = vand.u32 %v1516, 65535
        %v1518 = vshra.s32 %v1516, 16
        %v1519 = vcvt.s32.f32 %v1517
        %v1520 = vcvt.s32.f32 %v1518
        %1521 = vmin.xlane.f32.xlu0 %v1520
        %v1522 = vpop.xlane.xlu0 %1521
        %vm1523 = vcmp.eq.f32.partialorder %v1520, %v1522
        %v1524 = vsel %vm1523, %v1519, inf
        %1525 = vmin.xlane.f32.xlu0 %v1524
        %v1526 = vpop.xlane.xlu0 %1525
        %v1527 = vcvt.f32.s32 %v1526
        %v1528 = vcvt.f32.s32 %v1522
        %v1529 = vshll.u32 %v1528, 16
        %v1530 = vadd.s32 %v1529, %v1527
        %vm1531 = vcmp.lt.s32.totalorder %v1047, %v1048
        %v1532 = vsel %vm1531, %v1047, %v1048
        %v1533 = vand.u32 %v1532, 65535
        %v1534 = vshra.s32 %v1532, 16
        %v1535 = vcvt.s32.f32 %v1533
        %v1536 = vcvt.s32.f32 %v1534
        %1537 = vmin.xlane.f32.xlu0 %v1536
        %v1538 = vpop.xlane.xlu0 %1537
        %vm1539 = vcmp.eq.f32.partialorder %v1536, %v1538
        %v1540 = vsel %vm1539, %v1535, inf
        %1541 = vmin.xlane.f32.xlu0 %v1540
        %v1542 = vpop.xlane.xlu0 %1541
        %v1543 = vcvt.f32.s32 %v1542
        %v1544 = vcvt.f32.s32 %v1538
        %v1545 = vshll.u32 %v1544, 16
        %v1546 = vadd.s32 %v1545, %v1543
        %vm1547 = vcmp.lt.s32.totalorder %v1049, %v1050
        %v1548 = vsel %vm1547, %v1049, %v1050
        %v1549 = vand.u32 %v1548, 65535
        %v1550 = vshra.s32 %v1548, 16
        %v1551 = vcvt.s32.f32 %v1549
        %v1552 = vcvt.s32.f32 %v1550
        %1553 = vmin.xlane.f32.xlu0 %v1552
        %v1554 = vpop.xlane.xlu0 %1553
        %vm1555 = vcmp.eq.f32.partialorder %v1552, %v1554
        %v1556 = vsel %vm1555, %v1551, inf
        %1557 = vmin.xlane.f32.xlu0 %v1556
        %v1558 = vpop.xlane.xlu0 %1557
        %v1559 = vcvt.f32.s32 %v1558
        %v1560 = vcvt.f32.s32 %v1554
        %v1561 = vshll.u32 %v1560, 16
        %v1562 = vadd.s32 %v1561, %v1559
        %vm1563 = vcmp.eq.s32.totalorder %v921, %v1066
        %vm1564 = vcmp.eq.s32.totalorder %v922, %v1066
        %vm1565 = vcmp.eq.s32.totalorder %v921, %v1082
        %vm1566 = vcmp.eq.s32.totalorder %v922, %v1082
        %vm1567 = vcmp.eq.s32.totalorder %v921, %v1098
        %vm1568 = vcmp.eq.s32.totalorder %v922, %v1098
        %vm1569 = vcmp.eq.s32.totalorder %v921, %v1114
        %vm1570 = vcmp.eq.s32.totalorder %v922, %v1114
        %vm1571 = vcmp.eq.s32.totalorder %v921, %v1130
        %vm1572 = vcmp.eq.s32.totalorder %v922, %v1130
        %vm1573 = vcmp.eq.s32.totalorder %v921, %v1146
        %vm1574 = vcmp.eq.s32.totalorder %v922, %v1146
        %vm1575 = vcmp.eq.s32.totalorder %v921, %v1162
        %vm1576 = vcmp.eq.s32.totalorder %v922, %v1162
        %vm1577 = vcmp.eq.s32.totalorder %v921, %v1178
        %vm1578 = vcmp.eq.s32.totalorder %v922, %v1178
        %vm1579 = vcmp.eq.s32.totalorder %v921, %v1194
        %vm1580 = vcmp.eq.s32.totalorder %v922, %v1194
        %vm1581 = vcmp.eq.s32.totalorder %v921, %v1210
        %vm1582 = vcmp.eq.s32.totalorder %v922, %v1210
        %vm1583 = vcmp.eq.s32.totalorder %v921, %v1226
        %vm1584 = vcmp.eq.s32.totalorder %v922, %v1226
        %vm1585 = vcmp.eq.s32.totalorder %v921, %v1242
        %vm1586 = vcmp.eq.s32.totalorder %v922, %v1242
        %vm1587 = vcmp.eq.s32.totalorder %v921, %v1258
        %vm1588 = vcmp.eq.s32.totalorder %v922, %v1258
        %vm1589 = vcmp.eq.s32.totalorder %v921, %v1274
        %vm1590 = vcmp.eq.s32.totalorder %v922, %v1274
        %vm1591 = vcmp.eq.s32.totalorder %v921, %v1290
        %vm1592 = vcmp.eq.s32.totalorder %v922, %v1290
        %vm1593 = vcmp.eq.s32.totalorder %v921, %v1306
        %vm1594 = vcmp.eq.s32.totalorder %v922, %v1306
        %vm1595 = vcmp.eq.s32.totalorder %v921, %v1322
        %vm1596 = vcmp.eq.s32.totalorder %v922, %v1322
        %vm1597 = vcmp.eq.s32.totalorder %v921, %v1338
        %vm1598 = vcmp.eq.s32.totalorder %v922, %v1338
        %vm1599 = vcmp.eq.s32.totalorder %v921, %v1354
        %vm1600 = vcmp.eq.s32.totalorder %v922, %v1354
        %vm1601 = vcmp.eq.s32.totalorder %v921, %v1370
        %vm1602 = vcmp.eq.s32.totalorder %v922, %v1370
        %vm1603 = vcmp.eq.s32.totalorder %v921, %v1386
        %vm1604 = vcmp.eq.s32.totalorder %v922, %v1386
        %vm1605 = vcmp.eq.s32.totalorder %v921, %v1402
        %vm1606 = vcmp.eq.s32.totalorder %v922, %v1402
        %vm1607 = vcmp.eq.s32.totalorder %v921, %v1418
        %vm1608 = vcmp.eq.s32.totalorder %v922, %v1418
        %vm1609 = vcmp.eq.s32.totalorder %v921, %v1434
        %vm1610 = vcmp.eq.s32.totalorder %v922, %v1434
        %vm1611 = vcmp.eq.s32.totalorder %v921, %v1450
        %vm1612 = vcmp.eq.s32.totalorder %v922, %v1450
        %vm1613 = vcmp.eq.s32.totalorder %v921, %v1466
        %vm1614 = vcmp.eq.s32.totalorder %v922, %v1466
        %vm1615 = vcmp.eq.s32.totalorder %v921, %v1482
        %vm1616 = vcmp.eq.s32.totalorder %v922, %v1482
        %vm1617 = vcmp.eq.s32.totalorder %v921, %v1498
        %vm1618 = vcmp.eq.s32.totalorder %v922, %v1498
        %vm1619 = vcmp.eq.s32.totalorder %v921, %v1514
        %vm1620 = vcmp.eq.s32.totalorder %v922, %v1514
        %vm1621 = vcmp.eq.s32.totalorder %v921, %v1530
        %vm1622 = vcmp.eq.s32.totalorder %v922, %v1530
        %vm1623 = vcmp.eq.s32.totalorder %v921, %v1546
        %vm1624 = vcmp.eq.s32.totalorder %v922, %v1546
        %vm1625 = vcmp.eq.s32.totalorder %v921, %v1562
        %vm1626 = vcmp.eq.s32.totalorder %v922, %v1562
        %v1627 = vsel %vm1563, 1, 0
        %v1628 = vsel %vm1564, 1, 0
        %v1629 = vsel %vm1565, 1, 0
        %v1630 = vsel %vm1566, 1, 0
        %v1631 = vsel %vm1567, 1, 0
        %v1632 = vsel %vm1568, 1, 0
        %v1633 = vsel %vm1569, 1, 0
        %v1634 = vsel %vm1570, 1, 0
        %v1635 = vsel %vm1571, 1, 0
        %v1636 = vsel %vm1572, 1, 0
        %v1637 = vsel %vm1573, 1, 0
        %v1638 = vsel %vm1574, 1, 0
        %v1639 = vsel %vm1575, 1, 0
        %v1640 = vsel %vm1576, 1, 0
        %v1641 = vsel %vm1577, 1, 0
        %v1642 = vsel %vm1578, 1, 0
        %v1643 = vsel %vm1579, 1, 0
        %v1644 = vsel %vm1580, 1, 0
        %v1645 = vsel %vm1581, 1, 0
        %v1646 = vsel %vm1582, 1, 0
        %v1647 = vsel %vm1583, 1, 0
        %v1648 = vsel %vm1584, 1, 0
        %v1649 = vsel %vm1585, 1, 0
        %v1650 = vsel %vm1586, 1, 0
        %v1651 = vsel %vm1587, 1, 0
        %v1652 = vsel %vm1588, 1, 0
        %v1653 = vsel %vm1589, 1, 0
        %v1654 = vsel %vm1590, 1, 0
        %v1655 = vsel %vm1591, 1, 0
        %v1656 = vsel %vm1592, 1, 0
        %v1657 = vsel %vm1593, 1, 0
        %v1658 = vsel %vm1594, 1, 0
        %v1659 = vsel %vm1595, 1, 0
        %v1660 = vsel %vm1596, 1, 0
        %v1661 = vsel %vm1597, 1, 0
        %v1662 = vsel %vm1598, 1, 0
        %v1663 = vsel %vm1599, 1, 0
        %v1664 = vsel %vm1600, 1, 0
        %v1665 = vsel %vm1601, 1, 0
        %v1666 = vsel %vm1602, 1, 0
        %v1667 = vsel %vm1603, 1, 0
        %v1668 = vsel %vm1604, 1, 0
        %v1669 = vsel %vm1605, 1, 0
        %v1670 = vsel %vm1606, 1, 0
        %v1671 = vsel %vm1607, 1, 0
        %v1672 = vsel %vm1608, 1, 0
        %v1673 = vsel %vm1609, 1, 0
        %v1674 = vsel %vm1610, 1, 0
        %v1675 = vsel %vm1611, 1, 0
        %v1676 = vsel %vm1612, 1, 0
        %v1677 = vsel %vm1613, 1, 0
        %v1678 = vsel %vm1614, 1, 0
        %v1679 = vsel %vm1615, 1, 0
        %v1680 = vsel %vm1616, 1, 0
        %v1681 = vsel %vm1617, 1, 0
        %v1682 = vsel %vm1618, 1, 0
        %v1683 = vsel %vm1619, 1, 0
        %v1684 = vsel %vm1620, 1, 0
        %v1685 = vsel %vm1621, 1, 0
        %v1686 = vsel %vm1622, 1, 0
        %v1687 = vsel %vm1623, 1, 0
        %v1688 = vsel %vm1624, 1, 0
        %v1689 = vsel %vm1625, 1, 0
        %v1690 = vsel %vm1626, 1, 0
        %v1691 = vcvt.s32.f32 %v1627
        %v1692 = vcvt.s32.f32 %v1628
        %v1693 = vcvt.s32.f32 %v1629
        %v1694 = vcvt.s32.f32 %v1630
        %v1695 = vcvt.s32.f32 %v1631
        %v1696 = vcvt.s32.f32 %v1632
        %v1697 = vcvt.s32.f32 %v1633
        %v1698 = vcvt.s32.f32 %v1634
        %v1699 = vcvt.s32.f32 %v1635
        %v1700 = vcvt.s32.f32 %v1636
        %v1701 = vcvt.s32.f32 %v1637
        %v1702 = vcvt.s32.f32 %v1638
        %v1703 = vcvt.s32.f32 %v1639
        %v1704 = vcvt.s32.f32 %v1640
        %v1705 = vcvt.s32.f32 %v1641
        %v1706 = vcvt.s32.f32 %v1642
        %v1707 = vcvt.s32.f32 %v1643
        %v1708 = vcvt.s32.f32 %v1644
        %v1709 = vcvt.s32.f32 %v1645
        %v1710 = vcvt.s32.f32 %v1646
        %v1711 = vcvt.s32.f32 %v1647
        %v1712 = vcvt.s32.f32 %v1648
        %v1713 = vcvt.s32.f32 %v1649
        %v1714 = vcvt.s32.f32 %v1650
        %v1715 = vcvt.s32.f32 %v1651
        %v1716 = vcvt.s32.f32 %v1652
        %v1717 = vcvt.s32.f32 %v1653
        %v1718 = vcvt.s32.f32 %v1654
        %v1719 = vcvt.s32.f32 %v1655
        %v1720 = vcvt.s32.f32 %v1656
        %v1721 = vcvt.s32.f32 %v1657
        %v1722 = vcvt.s32.f32 %v1658
        %v1723 = vcvt.s32.f32 %v1659
        %v1724 = vcvt.s32.f32 %v1660
        %v1725 = vcvt.s32.f32 %v1661
        %v1726 = vcvt.s32.f32 %v1662
        %v1727 = vcvt.s32.f32 %v1663
        %v1728 = vcvt.s32.f32 %v1664
        %v1729 = vcvt.s32.f32 %v1665
        %v1730 = vcvt.s32.f32 %v1666
        %v1731 = vcvt.s32.f32 %v1667
        %v1732 = vcvt.s32.f32 %v1668
        %v1733 = vcvt.s32.f32 %v1669
        %v1734 = vcvt.s32.f32 %v1670
        %v1735 = vcvt.s32.f32 %v1671
        %v1736 = vcvt.s32.f32 %v1672
        %v1737 = vcvt.s32.f32 %v1673
        %v1738 = vcvt.s32.f32 %v1674
        %v1739 = vcvt.s32.f32 %v1675
        %v1740 = vcvt.s32.f32 %v1676
        %v1741 = vcvt.s32.f32 %v1677
        %v1742 = vcvt.s32.f32 %v1678
        %v1743 = vcvt.s32.f32 %v1679
        %v1744 = vcvt.s32.f32 %v1680
        %v1745 = vcvt.s32.f32 %v1681
        %v1746 = vcvt.s32.f32 %v1682
        %v1747 = vcvt.s32.f32 %v1683
        %v1748 = vcvt.s32.f32 %v1684
        %v1749 = vcvt.s32.f32 %v1685
        %v1750 = vcvt.s32.f32 %v1686
        %v1751 = vcvt.s32.f32 %v1687
        %v1752 = vcvt.s32.f32 %v1688
        %v1753 = vcvt.s32.f32 %v1689
        %v1754 = vcvt.s32.f32 %v1690
        %v1755 = vld [vmem:[%s3] sm:$0xff]
        %v1756 = vld [vmem:[%s3 + $0x8] sm:$0xff]
        %v1757 = vld [vmem:[%s3 + $0x10] sm:$0xff]
        %v1758 = vld [vmem:[%s3 + $0x18] sm:$0xff]
        %v1759 = vld [vmem:[%s3 + $0x20] sm:$0xff]
        %v1760 = vld [vmem:[%s3 + $0x28] sm:$0xff]
        %v1761 = vld [vmem:[%s3 + $0x30] sm:$0xff]
        %v1762 = vld [vmem:[%s3 + $0x38] sm:$0xff]
        %v1763 = vld [vmem:[%s3 + $0x40] sm:$0xff]
        %v1764 = vld [vmem:[%s3 + $0x48] sm:$0xff]
        %v1765 = vld [vmem:[%s3 + $0x50] sm:$0xff]
        %v1766 = vld [vmem:[%s3 + $0x58] sm:$0xff]
        %v1767 = vld [vmem:[%s3 + $0x60] sm:$0xff]
        %v1768 = vld [vmem:[%s3 + $0x68] sm:$0xff]
        %v1769 = vld [vmem:[%s3 + $0x70] sm:$0xff]
        %v1770 = vld [vmem:[%s3 + $0x78] sm:$0xff]
        %v1771 = vld [vmem:[%s3 + $0x80] sm:$0xff]
        %v1772 = vld [vmem:[%s3 + $0x88] sm:$0xff]
        %v1773 = vld [vmem:[%s3 + $0x90] sm:$0xff]
        %v1774 = vld [vmem:[%s3 + $0x98] sm:$0xff]
        %v1775 = vld [vmem:[%s3 + $0xa0] sm:$0xff]
        %v1776 = vld [vmem:[%s3 + $0xa8] sm:$0xff]
        %v1777 = vld [vmem:[%s3 + $0xb0] sm:$0xff]
        %v1778 = vld [vmem:[%s3 + $0xb8] sm:$0xff]
        %v1779 = vld [vmem:[%s3 + $0xc0] sm:$0xff]
        %v1780 = vld [vmem:[%s3 + $0xc8] sm:$0xff]
        %v1781 = vld [vmem:[%s3 + $0xd0] sm:$0xff]
        %v1782 = vld [vmem:[%s3 + $0xd8] sm:$0xff]
        %v1783 = vld [vmem:[%s3 + $0xe0] sm:$0xff]
        %v1784 = vld [vmem:[%s3 + $0xe8] sm:$0xff]
        %v1785 = vld [vmem:[%s3 + $0xf0] sm:$0xff]
        %v1786 = vld [vmem:[%s3 + $0xf8] sm:$0xff]
        %1787 = vmatpush.msra.mxu0 %v1770
        %1788 = vmatpush.msra.mxu0 %v1769
        %1789 = vmatpush.msra.mxu0 %v1768
        %1790 = vmatpush.msra.mxu0 %v1767
        %1791 = vmatpush.msra.mxu0 %v1766
        %1792 = vmatpush.msra.mxu0 %v1765
        %1793 = vmatpush.msra.mxu0 %v1764
        %1794 = vmatpush.msra.mxu0 %v1763
        %1795 = vmatpush.msra.mxu0 %v1762
        %1796 = vmatpush.msra.mxu0 %v1761
        %1797 = vmatpush.msra.mxu0 %v1760
        %1798 = vmatpush.msra.mxu0 %v1759
        %1799 = vmatpush.msra.mxu0 %v1758
        %1800 = vmatpush.msra.mxu0 %v1757
        %1801 = vmatpush.msra.mxu0 %v1756
        %1802 = vmatpush.msra.mxu0 %v1755
        %1803 = vmatmul.f32.gmra.mxu0 %v1691
        %v1804 = vpop.f32.mrf.mxu0
        %v1805 = vadd.f32 0.0, %v1804
        %1806 = vmatmul.f32.gmra.mxu0 %v1693
        %v1807 = vpop.f32.mrf.mxu0
        %v1808 = vadd.f32 0.0, %v1807
        %1809 = vmatmul.f32.gmra.mxu0 %v1695
        %v1810 = vpop.f32.mrf.mxu0
        %v1811 = vadd.f32 0.0, %v1810
        %1812 = vmatmul.f32.gmra.mxu0 %v1697
        %v1813 = vpop.f32.mrf.mxu0
        %v1814 = vadd.f32 0.0, %v1813
        %1815 = vmatmul.f32.gmra.mxu0 %v1699
        %v1816 = vpop.f32.mrf.mxu0
        %v1817 = vadd.f32 0.0, %v1816
        %1818 = vmatmul.f32.gmra.mxu0 %v1701
        %v1819 = vpop.f32.mrf.mxu0
        %v1820 = vadd.f32 0.0, %v1819
        %1821 = vmatmul.f32.gmra.mxu0 %v1703
        %v1822 = vpop.f32.mrf.mxu0
        %v1823 = vadd.f32 0.0, %v1822
        %1824 = vmatmul.f32.gmra.mxu0 %v1705
        %v1825 = vpop.f32.mrf.mxu0
        %v1826 = vadd.f32 0.0, %v1825
        %1827 = vmatmul.f32.gmra.mxu0 %v1707
        %v1828 = vpop.f32.mrf.mxu0
        %v1829 = vadd.f32 0.0, %v1828
        %1830 = vmatmul.f32.gmra.mxu0 %v1709
        %v1831 = vpop.f32.mrf.mxu0
        %v1832 = vadd.f32 0.0, %v1831
        %1833 = vmatmul.f32.gmra.mxu0 %v1711
        %v1834 = vpop.f32.mrf.mxu0
        %v1835 = vadd.f32 0.0, %v1834
        %1836 = vmatmul.f32.gmra.mxu0 %v1713
        %v1837 = vpop.f32.mrf.mxu0
        %v1838 = vadd.f32 0.0, %v1837
        %1839 = vmatmul.f32.gmra.mxu0 %v1715
        %v1840 = vpop.f32.mrf.mxu0
        %v1841 = vadd.f32 0.0, %v1840
        %1842 = vmatmul.f32.gmra.mxu0 %v1717
        %v1843 = vpop.f32.mrf.mxu0
        %v1844 = vadd.f32 0.0, %v1843
        %1845 = vmatmul.f32.gmra.mxu0 %v1719
        %v1846 = vpop.f32.mrf.mxu0
        %v1847 = vadd.f32 0.0, %v1846
        %1848 = vmatmul.f32.gmra.mxu0 %v1721
        %v1849 = vpop.f32.mrf.mxu0
        %v1850 = vadd.f32 0.0, %v1849
        %1851 = vmatmul.f32.gmra.mxu0 %v1723
        %v1852 = vpop.f32.mrf.mxu0
        %v1853 = vadd.f32 0.0, %v1852
        %1854 = vmatmul.f32.gmra.mxu0 %v1725
        %v1855 = vpop.f32.mrf.mxu0
        %v1856 = vadd.f32 0.0, %v1855
        %1857 = vmatmul.f32.gmra.mxu0 %v1727
        %v1858 = vpop.f32.mrf.mxu0
        %v1859 = vadd.f32 0.0, %v1858
        %1860 = vmatmul.f32.gmra.mxu0 %v1729
        %v1861 = vpop.f32.mrf.mxu0
        %v1862 = vadd.f32 0.0, %v1861
        %1863 = vmatmul.f32.gmra.mxu0 %v1731
        %v1864 = vpop.f32.mrf.mxu0
        %v1865 = vadd.f32 0.0, %v1864
        %1866 = vmatmul.f32.gmra.mxu0 %v1733
        %v1867 = vpop.f32.mrf.mxu0
        %v1868 = vadd.f32 0.0, %v1867
        %1869 = vmatmul.f32.gmra.mxu0 %v1735
        %v1870 = vpop.f32.mrf.mxu0
        %v1871 = vadd.f32 0.0, %v1870
        %1872 = vmatmul.f32.gmra.mxu0 %v1737
        %v1873 = vpop.f32.mrf.mxu0
        %v1874 = vadd.f32 0.0, %v1873
        %1875 = vmatmul.f32.gmra.mxu0 %v1739
        %v1876 = vpop.f32.mrf.mxu0
        %v1877 = vadd.f32 0.0, %v1876
        %1878 = vmatmul.f32.gmra.mxu0 %v1741
        %v1879 = vpop.f32.mrf.mxu0
        %v1880 = vadd.f32 0.0, %v1879
        %1881 = vmatmul.f32.gmra.mxu0 %v1743
        %v1882 = vpop.f32.mrf.mxu0
        %v1883 = vadd.f32 0.0, %v1882
        %1884 = vmatmul.f32.gmra.mxu0 %v1745
        %v1885 = vpop.f32.mrf.mxu0
        %v1886 = vadd.f32 0.0, %v1885
        %1887 = vmatmul.f32.gmra.mxu0 %v1747
        %v1888 = vpop.f32.mrf.mxu0
        %v1889 = vadd.f32 0.0, %v1888
        %1890 = vmatmul.f32.gmra.mxu0 %v1749
        %v1891 = vpop.f32.mrf.mxu0
        %v1892 = vadd.f32 0.0, %v1891
        %1893 = vmatmul.f32.gmra.mxu0 %v1751
        %v1894 = vpop.f32.mrf.mxu0
        %v1895 = vadd.f32 0.0, %v1894
        %1896 = vmatmul.f32.gmra.mxu0 %v1753
        %v1897 = vpop.f32.mrf.mxu0
        %v1898 = vadd.f32 0.0, %v1897
        %1899 = vdwg.mxu0
        %1900 = vmatpush.msra.mxu0 %v1786
        %1901 = vmatpush.msra.mxu0 %v1785
        %1902 = vmatpush.msra.mxu0 %v1784
        %1903 = vmatpush.msra.mxu0 %v1783
        %1904 = vmatpush.msra.mxu0 %v1782
        %1905 = vmatpush.msra.mxu0 %v1781
        %1906 = vmatpush.msra.mxu0 %v1780
        %1907 = vmatpush.msra.mxu0 %v1779
        %1908 = vmatpush.msra.mxu0 %v1778
        %1909 = vmatpush.msra.mxu0 %v1777
        %1910 = vmatpush.msra.mxu0 %v1776
        %1911 = vmatpush.msra.mxu0 %v1775
        %1912 = vmatpush.msra.mxu0 %v1774
        %1913 = vmatpush.msra.mxu0 %v1773
        %1914 = vmatpush.msra.mxu0 %v1772
        %1915 = vmatpush.msra.mxu0 %v1771
        %1916 = vmatmul.f32.gmra.mxu0 %v1692
        %v1917 = vpop.f32.mrf.mxu0
        %v1918 = vadd.f32 %v1805, %v1917
        %1919 = vmatmul.f32.gmra.mxu0 %v1694
        %v1920 = vpop.f32.mrf.mxu0
        %v1921 = vadd.f32 %v1808, %v1920
        %1922 = vmatmul.f32.gmra.mxu0 %v1696
        %v1923 = vpop.f32.mrf.mxu0
        %v1924 = vadd.f32 %v1811, %v1923
        %1925 = vmatmul.f32.gmra.mxu0 %v1698
        %v1926 = vpop.f32.mrf.mxu0
        %v1927 = vadd.f32 %v1814, %v1926
        %1928 = vmatmul.f32.gmra.mxu0 %v1700
        %v1929 = vpop.f32.mrf.mxu0
        %v1930 = vadd.f32 %v1817, %v1929
        %1931 = vmatmul.f32.gmra.mxu0 %v1702
        %v1932 = vpop.f32.mrf.mxu0
        %v1933 = vadd.f32 %v1820, %v1932
        %1934 = vmatmul.f32.gmra.mxu0 %v1704
        %v1935 = vpop.f32.mrf.mxu0
        %v1936 = vadd.f32 %v1823, %v1935
        %1937 = vmatmul.f32.gmra.mxu0 %v1706
        %v1938 = vpop.f32.mrf.mxu0
        %v1939 = vadd.f32 %v1826, %v1938
        %1940 = vmatmul.f32.gmra.mxu0 %v1708
        %v1941 = vpop.f32.mrf.mxu0
        %v1942 = vadd.f32 %v1829, %v1941
        %1943 = vmatmul.f32.gmra.mxu0 %v1710
        %v1944 = vpop.f32.mrf.mxu0
        %v1945 = vadd.f32 %v1832, %v1944
        %1946 = vmatmul.f32.gmra.mxu0 %v1712
        %v1947 = vpop.f32.mrf.mxu0
        %v1948 = vadd.f32 %v1835, %v1947
        %1949 = vmatmul.f32.gmra.mxu0 %v1714
        %v1950 = vpop.f32.mrf.mxu0
        %v1951 = vadd.f32 %v1838, %v1950
        %1952 = vmatmul.f32.gmra.mxu0 %v1716
        %v1953 = vpop.f32.mrf.mxu0
        %v1954 = vadd.f32 %v1841, %v1953
        %1955 = vmatmul.f32.gmra.mxu0 %v1718
        %v1956 = vpop.f32.mrf.mxu0
        %v1957 = vadd.f32 %v1844, %v1956
        %1958 = vmatmul.f32.gmra.mxu0 %v1720
        %v1959 = vpop.f32.mrf.mxu0
        %v1960 = vadd.f32 %v1847, %v1959
        %1961 = vmatmul.f32.gmra.mxu0 %v1722
        %v1962 = vpop.f32.mrf.mxu0
        %v1963 = vadd.f32 %v1850, %v1962
        %1964 = vmatmul.f32.gmra.mxu0 %v1724
        %v1965 = vpop.f32.mrf.mxu0
        %v1966 = vadd.f32 %v1853, %v1965
        %1967 = vmatmul.f32.gmra.mxu0 %v1726
        %v1968 = vpop.f32.mrf.mxu0
        %v1969 = vadd.f32 %v1856, %v1968
        %1970 = vmatmul.f32.gmra.mxu0 %v1728
        %v1971 = vpop.f32.mrf.mxu0
        %v1972 = vadd.f32 %v1859, %v1971
        %1973 = vmatmul.f32.gmra.mxu0 %v1730
        %v1974 = vpop.f32.mrf.mxu0
        %v1975 = vadd.f32 %v1862, %v1974
        %1976 = vmatmul.f32.gmra.mxu0 %v1732
        %v1977 = vpop.f32.mrf.mxu0
        %v1978 = vadd.f32 %v1865, %v1977
        %1979 = vmatmul.f32.gmra.mxu0 %v1734
        %v1980 = vpop.f32.mrf.mxu0
        %v1981 = vadd.f32 %v1868, %v1980
        %1982 = vmatmul.f32.gmra.mxu0 %v1736
        %v1983 = vpop.f32.mrf.mxu0
        %v1984 = vadd.f32 %v1871, %v1983
        %1985 = vmatmul.f32.gmra.mxu0 %v1738
        %v1986 = vpop.f32.mrf.mxu0
        %v1987 = vadd.f32 %v1874, %v1986
        %1988 = vmatmul.f32.gmra.mxu0 %v1740
        %v1989 = vpop.f32.mrf.mxu0
        %v1990 = vadd.f32 %v1877, %v1989
        %1991 = vmatmul.f32.gmra.mxu0 %v1742
        %v1992 = vpop.f32.mrf.mxu0
        %v1993 = vadd.f32 %v1880, %v1992
        %1994 = vmatmul.f32.gmra.mxu0 %v1744
        %v1995 = vpop.f32.mrf.mxu0
        %v1996 = vadd.f32 %v1883, %v1995
        %1997 = vmatmul.f32.gmra.mxu0 %v1746
        %v1998 = vpop.f32.mrf.mxu0
        %v1999 = vadd.f32 %v1886, %v1998
        %2000 = vmatmul.f32.gmra.mxu0 %v1748
        %v2001 = vpop.f32.mrf.mxu0
        %v2002 = vadd.f32 %v1889, %v2001
        %2003 = vmatmul.f32.gmra.mxu0 %v1750
        %v2004 = vpop.f32.mrf.mxu0
        %v2005 = vadd.f32 %v1892, %v2004
        %2006 = vmatmul.f32.gmra.mxu0 %v1752
        %v2007 = vpop.f32.mrf.mxu0
        %v2008 = vadd.f32 %v1895, %v2007
        %2009 = vmatmul.f32.gmra.mxu0 %v1754
        %v2010 = vpop.f32.mrf.mxu0
        %v2011 = vadd.f32 %v1898, %v2010
        %2012 = vdwg.mxu0
        %2013 = vst.msk [vmem:[%s237] sm:$0xff] %vm335, %v1918
        %2014 = vst.msk [vmem:[%s237 + $0x8] sm:$0xff] %vm335, %v1921
        %2015 = vst.msk [vmem:[%s237 + $0x10] sm:$0xff] %vm335, %v1924
        %2016 = vst.msk [vmem:[%s237 + $0x18] sm:$0xff] %vm335, %v1927
        %2017 = vst.msk [vmem:[%s237 + $0x20] sm:$0xff] %vm335, %v1930
        %2018 = vst.msk [vmem:[%s237 + $0x28] sm:$0xff] %vm335, %v1933
        %2019 = vst.msk [vmem:[%s237 + $0x30] sm:$0xff] %vm335, %v1936
        %2020 = vst.msk [vmem:[%s237 + $0x38] sm:$0xff] %vm335, %v1939
        %2021 = vst.msk [vmem:[%s237 + $0x40] sm:$0xff] %vm335, %v1942
        %2022 = vst.msk [vmem:[%s237 + $0x48] sm:$0xff] %vm335, %v1945
        %2023 = vst.msk [vmem:[%s237 + $0x50] sm:$0xff] %vm335, %v1948
        %2024 = vst.msk [vmem:[%s237 + $0x58] sm:$0xff] %vm335, %v1951
        %2025 = vst.msk [vmem:[%s237 + $0x60] sm:$0xff] %vm335, %v1954
        %2026 = vst.msk [vmem:[%s237 + $0x68] sm:$0xff] %vm335, %v1957
        %2027 = vst.msk [vmem:[%s237 + $0x70] sm:$0xff] %vm335, %v1960
        %2028 = vst.msk [vmem:[%s237 + $0x78] sm:$0xff] %vm335, %v1963
        %2029 = vst.msk [vmem:[%s237 + $0x80] sm:$0xff] %vm335, %v1966
        %2030 = vst.msk [vmem:[%s237 + $0x88] sm:$0xff] %vm335, %v1969
        %2031 = vst.msk [vmem:[%s237 + $0x90] sm:$0xff] %vm335, %v1972
        %2032 = vst.msk [vmem:[%s237 + $0x98] sm:$0xff] %vm335, %v1975
        %2033 = vst.msk [vmem:[%s237 + $0xa0] sm:$0xff] %vm335, %v1978
        %2034 = vst.msk [vmem:[%s237 + $0xa8] sm:$0xff] %vm335, %v1981
        %2035 = vst.msk [vmem:[%s237 + $0xb0] sm:$0xff] %vm335, %v1984
        %2036 = vst.msk [vmem:[%s237 + $0xb8] sm:$0xff] %vm335, %v1987
        %2037 = vst.msk [vmem:[%s237 + $0xc0] sm:$0xff] %vm335, %v1990
        %2038 = vst.msk [vmem:[%s237 + $0xc8] sm:$0xff] %vm335, %v1993
        %2039 = vst.msk [vmem:[%s237 + $0xd0] sm:$0xff] %vm335, %v1996
        %2040 = vst.msk [vmem:[%s237 + $0xd8] sm:$0xff] %vm335, %v1999
        %2041 = vst.msk [vmem:[%s237 + $0xe0] sm:$0xff] %vm335, %v2002
        %2042 = vst.msk [vmem:[%s237 + $0xe8] sm:$0xff] %vm335, %v2005
        %2043 = vst.msk [vmem:[%s237 + $0xf0] sm:$0xff] %vm335, %v2008
        %2044 = vst.msk [vmem:[%s237 + $0xf8] sm:$0xff] %vm335, %v2011
        %s2045 = smul.u32 %s20, 256
        %v2046 = vstv %s2045
        %v2047 = vadd.s32 %v2046, %v921
        %v2048 = vadd.s32 %v2046, %v922
        %vm2049 = vcmp.lt.s32.totalorder %v2047, 512
        %vm2050 = vcmp.lt.s32.totalorder %v2048, 512
        %v2051 = vsel %vm2049, 1, 0
        %v2052 = vsel %vm2050, 1, 0
        %v2053 = vcvt.s32.f32 %v2051
        %v2054 = vcvt.s32.f32 %v2052
        %2055 = vmatpush.msra.mxu0 %v1721
        %2056 = vmatpush.msra.mxu0 %v1719
        %2057 = vmatpush.msra.mxu0 %v1717
        %2058 = vmatpush.msra.mxu0 %v1715
        %2059 = vmatpush.msra.mxu0 %v1713
        %2060 = vmatpush.msra.mxu0 %v1711
        %2061 = vmatpush.msra.mxu0 %v1709
        %2062 = vmatpush.msra.mxu0 %v1707
        %2063 = vmatpush.msra.mxu0 %v1705
        %2064 = vmatpush.msra.mxu0 %v1703
        %2065 = vmatpush.msra.mxu0 %v1701
        %2066 = vmatpush.msra.mxu0 %v1699
        %2067 = vmatpush.msra.mxu0 %v1697
        %2068 = vmatpush.msra.mxu0 %v1695
        %2069 = vmatpush.msra.mxu0 %v1693
        %2070 = vmatpush.msra.mxu0 %v1691
        %2071 = vmatmul.f32.gmra.mxu0 %v2053
        %v2072 = vpop.f32.mrf.mxu0
        %v2073 = vadd.f32 0.0, %v2072
        %2074 = vdwg.mxu0
        %2075 = vmatpush.msra.mxu0 %v1753
        %2076 = vmatpush.msra.mxu0 %v1751
        %2077 = vmatpush.msra.mxu0 %v1749
        %2078 = vmatpush.msra.mxu0 %v1747
        %2079 = vmatpush.msra.mxu0 %v1745
        %2080 = vmatpush.msra.mxu0 %v1743
        %2081 = vmatpush.msra.mxu0 %v1741
        %2082 = vmatpush.msra.mxu0 %v1739
        %2083 = vmatpush.msra.mxu0 %v1737
        %2084 = vmatpush.msra.mxu0 %v1735
        %2085 = vmatpush.msra.mxu0 %v1733
        %2086 = vmatpush.msra.mxu0 %v1731
        %2087 = vmatpush.msra.mxu0 %v1729
        %2088 = vmatpush.msra.mxu0 %v1727
        %2089 = vmatpush.msra.mxu0 %v1725
        %2090 = vmatpush.msra.mxu0 %v1723
        %2091 = vmatmul.f32.gmra.mxu0 %v2054
        %v2092 = vpop.f32.mrf.mxu0
        %v2093 = vadd.f32 %v2073, %v2092
        %2094 = vdwg.mxu0
        %2095 = vmatpush.msra.mxu0 %v1722
        %2096 = vmatpush.msra.mxu0 %v1720
        %2097 = vmatpush.msra.mxu0 %v1718
        %2098 = vmatpush.msra.mxu0 %v1716
        %2099 = vmatpush.msra.mxu0 %v1714
        %2100 = vmatpush.msra.mxu0 %v1712
        %2101 = vmatpush.msra.mxu0 %v1710
        %2102 = vmatpush.msra.mxu0 %v1708
        %2103 = vmatpush.msra.mxu0 %v1706
        %2104 = vmatpush.msra.mxu0 %v1704
        %2105 = vmatpush.msra.mxu0 %v1702
        %2106 = vmatpush.msra.mxu0 %v1700
        %2107 = vmatpush.msra.mxu0 %v1698
        %2108 = vmatpush.msra.mxu0 %v1696
        %2109 = vmatpush.msra.mxu0 %v1694
        %2110 = vmatpush.msra.mxu0 %v1692
        %2111 = vmatmul.f32.gmra.mxu0 %v2053
        %v2112 = vpop.f32.mrf.mxu0
        %v2113 = vadd.f32 0.0, %v2112
        %2114 = vdwg.mxu0
        %2115 = vmatpush.msra.mxu0 %v1754
        %2116 = vmatpush.msra.mxu0 %v1752
        %2117 = vmatpush.msra.mxu0 %v1750
        %2118 = vmatpush.msra.mxu0 %v1748
        %2119 = vmatpush.msra.mxu0 %v1746
        %2120 = vmatpush.msra.mxu0 %v1744
        %2121 = vmatpush.msra.mxu0 %v1742
        %2122 = vmatpush.msra.mxu0 %v1740
        %2123 = vmatpush.msra.mxu0 %v1738
        %2124 = vmatpush.msra.mxu0 %v1736
        %2125 = vmatpush.msra.mxu0 %v1734
        %2126 = vmatpush.msra.mxu0 %v1732
        %2127 = vmatpush.msra.mxu0 %v1730
        %2128 = vmatpush.msra.mxu0 %v1728
        %2129 = vmatpush.msra.mxu0 %v1726
        %2130 = vmatpush.msra.mxu0 %v1724
        %2131 = vmatmul.f32.gmra.mxu0 %v2054
        %v2132 = vpop.f32.mrf.mxu0
        %v2133 = vadd.f32 %v2113, %v2132
        %2134 = vdwg.mxu0
        %v2137 = vrot.slane %v2133, 7
        %vm2138 = vcmask 1040384
        %v2139 = vsel %vm2138, %v2093, %v2137
        %v2141 = vlaneseq
        %vm2142 = vcmp.ge.s32.totalorder %v2141, 0
        %vm2143 = vcmp.lt.s32.totalorder %v2141, 256
        %vm2144 = vmand %vm2142, %vm2143
        %2145 = vst.msk [vmem:[%s226] sm:$0x3] %vm2144, %v2139
        %s2146 = smul.u32 32, %s20
        %p2147 = scmp.lt.s32.totalorder %s2146, 63
        %s2148 = scalar_select %p2147, %s2146, 63
        %s2149 = smul.addr %s2148, 8
        %s2150 = scalar_lea.vmem %s4, %s2149
        %s2151 = sand.u32 %s143, 1
        %s2152 = scalar_lea.sflag [#allocation3], %s2151
        %s2153 = sand.u32 %s143, 1
        %s2154 = smul.addr %s2153, 2
        %s2155 = scalar_lea.vmem [#allocation2], %s2154
        // Predicated region
        $region37: #{tpu_custom_call.1} parent=35 // pred_check
          %p2156 = pneg %p127
        $region38: #{tpu_custom_call.1} parent=35 // pred_check_branch
          %2158 = sbr.rel (%p2156) target = $region40
        $region39: #{tpu_custom_call.1} parent=35 // pred_region
          %s2159 = smul.u32 32, %s20
        $region40: #{tpu_custom_call.1} parent=35 // pred_fallthru
          _
        // Predicated region
        $region41: #{tpu_custom_call.1} parent=35 // pred_check
          %p2160 = pneg %p153
        $region42: #{tpu_custom_call.1} parent=35 // pred_check_branch
          %2162 = sbr.rel (%p2160) target = $region44
        $region43: #{tpu_custom_call.1} parent=35 // pred_region
          %2164 = vsyncadd %s2152, 0
          %s2165 = smul.addr %s20, 2
          %s2166 = scalar_lea.hbm %s5, %s2165
          %s2168 = sshll.u32 %s2155, 4
          %s2169 = int_to_ptr.vmem [resolvable:$true] %s2168
          %s2170 = sshll.u32 %s2166, 4
          %s2171 = int_to_ptr.hbm [resolvable:$true] %s2170
          %2173 = dma.vmem_to_hbm [thread:$0]  %s2169, 32, %s2171, %s2152
        $region44: #{tpu_custom_call.1} parent=35 // pred_fallthru
          _
      $region36: #{tpu_custom_call.1} parent=5 // pred_fallthru
        _
      %p2174 = scmp.le.s32.totalorder 2, %s15
      // Predicated region
      $region45: #{tpu_custom_call.1} parent=5 // pred_check
        %p2175 = pneg %p2174
      $region46: #{tpu_custom_call.1} parent=5 // pred_check_branch
        %2177 = sbr.rel (%p2175) target = $region48
      $region47: #{tpu_custom_call.1} parent=5 // pred_region
        %s2178 = ssub.s32 %s15, 2
        // Predicated region
        $region49: #{tpu_custom_call.1} parent=47 // pred_check
          %p2179 = pneg %p133
        $region50: #{tpu_custom_call.1} parent=47 // pred_check_branch
          %2181 = sbr.rel (%p2179) target = $region52
        $region51: #{tpu_custom_call.1} parent=47 // pred_region
          %s2182 = smul.u32 32, %s21
          %p2183 = scmp.lt.s32.totalorder %s2182, 63
          %s2184 = scalar_select %p2183, %s2182, 63
          %s2185 = smul.addr %s2184, 8
          %s2186 = scalar_lea.vmem %s4, %s2185
        $region52: #{tpu_custom_call.1} parent=47 // pred_fallthru
          _
        // Predicated region
        $region53: #{tpu_custom_call.1} parent=47 // pred_check
          %p2187 = pneg %p159
        $region54: #{tpu_custom_call.1} parent=47 // pred_check_branch
          %2189 = sbr.rel (%p2187) target = $region56
        $region55: #{tpu_custom_call.1} parent=47 // pred_region
          %s2190 = sand.u32 %s144, 1
          %s2191 = scalar_lea.sflag [#allocation3], %s2190
          %s2192 = sand.u32 %s144, 1
          %s2193 = smul.addr %s2192, 2
          %s2194 = scalar_lea.vmem [#allocation2], %s2193
          %2196 = dma.done %s2191, 32
        $region56: #{tpu_custom_call.1} parent=47 // pred_fallthru
          _
      $region48: #{tpu_custom_call.1} parent=5 // pred_fallthru
        _
    $region6: #{tpu_custom_call.1} parent=1 // loop_footer
      %s19 = sadd.s32 1, %s15
    $region7: #{tpu_custom_call.1} parent=1 // loop_footer_branch
      %14 = sbr.rel target = $region3
    $region8: #{tpu_custom_call.1} parent=1 // loop_exit
      _
    %2197 = vsyncpa [#allocation3], 1
    %s2198 = scalar_lea.sflag [#allocation3], 1
    %2199 = vsyncpa %s2198, 1

</llo_original>
